<compile_context>
chip_gen: v5e
topology: v5e:2x2
jax: 0.10.0
libtpu: 0.0.40
codegen_flags: <defaults>
</compile_context>

<pallas_src>
import jax
import jax.numpy as jnp
from jax.experimental import pallas as pl
from jax.experimental.pallas import tpu as pltpu

# Synthetic hyperparameters (the module's globals feature_num / n_actions).
FEATURE_NUM = 256      # feature_num
HIDDEN = 512           # fixed by module
N_ACTIONS = 128        # n_actions
MAX_BATCH_TILE = 512   # rows per grid step at large batch


def _round_up(x, m):
    return (x + m - 1) // m * m


def actor_kernel(x_ref, w1_ref, b1_ref, w2_ref, b2_ref, w3_ref, b3_ref, o_ref):
    # x arrives f32; cast to bf16 in-kernel (cheap VPU op, hides under MXU work).
    x_bf = x_ref[...].astype(jnp.bfloat16)
    # fc1 + ReLU   (bf16 operands, f32 accumulate on the MXU)
    h1 = jnp.dot(x_bf, w1_ref[...], preferred_element_type=jnp.float32)
    h1 = jnp.maximum(h1 + b1_ref[...], 0.0)
    # fc2 + ReLU
    h2 = jnp.dot(h1.astype(jnp.bfloat16), w2_ref[...],
                 preferred_element_type=jnp.float32)
    h2 = jnp.maximum(h2 + b2_ref[...], 0.0)
    # out + tanh * 0.01
    a = jnp.dot(h2.astype(jnp.bfloat16), w3_ref[...],
                preferred_element_type=jnp.float32)
    o_ref[...] = (jnp.tanh(a + b3_ref[...]) * 0.01).astype(o_ref.dtype)


def _choose_bm(B):
    """Pick the batch (M) tile size.

    B <= 512: whole batch in one grid step (rounded to 16 rows for clean bf16
              sublane packing of the in-kernel cast).
    B  > 512: 256-multiple tiles capped at 512, sized so the parallel grid has
              at least 2 steps (shards across both TensorCores on v7x).
    """
    if B <= MAX_BATCH_TILE:
        return _round_up(B, 16)
    return min(MAX_BATCH_TILE, _round_up(pl.cdiv(B, 2), 256))


@jax.jit
def actor_forward(x, w1, b1, w2, b2, w3, b3):
    """x: [B, F] f32. w*: [in, out] (bf16 recommended, pre-cast once). b*: [1, out] f32."""
    B, F = x.shape
    A = w3.shape[1]

    bm = _choose_bm(B)
    grid = (pl.cdiv(B, bm),)   # ragged last tile handled by Pallas masking

    full = lambda shape: pl.BlockSpec(shape, lambda i: (0,) * len(shape))

    flops = 2 * B * (F * HIDDEN + HIDDEN * HIDDEN + HIDDEN * A)
    bytes_accessed = (
        B * F * 4                                                          # x (f32)
        + (F * HIDDEN + HIDDEN * HIDDEN + HIDDEN * A) * w1.dtype.itemsize  # weights
        + (HIDDEN + HIDDEN + A) * 4                                        # biases (f32)
        + B * A * 4                                                        # output (f32)
    )

    out = pl.pallas_call(
        actor_kernel,
        out_shape=jax.ShapeDtypeStruct((B, A), jnp.float32),
        grid_spec=pltpu.PrefetchScalarGridSpec(
            num_scalar_prefetch=0,
            grid=grid,
            in_specs=[
                pl.BlockSpec((bm, F), lambda i: (i, 0)),   # x tile (f32)
                full((F, HIDDEN)),                         # w1 (in, out), resident
                full((1, HIDDEN)),                         # b1
                full((HIDDEN, HIDDEN)),                    # w2
                full((1, HIDDEN)),                         # b2
                full((HIDDEN, A)),                         # w3
                full((1, A)),                              # b3
            ],
            out_specs=pl.BlockSpec((bm, A), lambda i: (i, 0)),
        ),
        compiler_params=pltpu.CompilerParams(
            dimension_semantics=("parallel",),
        ),
        cost_estimate=pl.CostEstimate(
            flops=flops,
            transcendentals=B * A,
            bytes_accessed=bytes_accessed,
        ),
    )(x, w1, b1, w2, b2, w3, b3)

    return out


def init_linear(key, fan_in, fan_out):
    """PyTorch nn.Linear default init: U(-1/sqrt(fan_in), 1/sqrt(fan_in)).
    Weight returned pre-transposed to (in, out); bias as (1, out)."""
    kw, kb = jax.random.split(key)
    bound = 1.0 / jnp.sqrt(jnp.float32(fan_in))
    w = jax.random.uniform(kw, (fan_in, fan_out), jnp.float32, -bound, bound)
    b = jax.random.uniform(kb, (1, fan_out), jnp.float32, -bound, bound)
    return w, b


def reference_forward(x, w1, b1, w2, b2, w3, b3):
    h1 = jnp.maximum(x @ w1 + b1, 0.0)
    h2 = jnp.maximum(h1 @ w2 + b2, 0.0)
    return jnp.tanh(h2 @ w3 + b3) * 0.01


if __name__ == "__main__":
    key = jax.random.PRNGKey(0)
    kx, k1, k2, k3 = jax.random.split(key, 4)

    w1, b1 = init_linear(k1, FEATURE_NUM, HIDDEN)
    w2, b2 = init_linear(k2, HIDDEN, HIDDEN)
    w3, b3 = init_linear(k3, HIDDEN, N_ACTIONS)

    # Pre-cast weights to bf16 ONCE (outside the jitted forward) -> no per-call
    # f32->bf16 conversion traffic. Biases stay f32.
    w1_bf = w1.astype(jnp.bfloat16)
    w2_bf = w2.astype(jnp.bfloat16)
    w3_bf = w3.astype(jnp.bfloat16)

    # Small smoke-test batch (one grid step).
    B = 16
    x = jax.random.normal(kx, (B, FEATURE_NUM), jnp.float32)
    out = jax.block_until_ready(actor_forward(x, w1_bf, b1, w2_bf, b2, w3_bf, b3))
    ref = reference_forward(x, w1, b1, w2, b2, w3, b3)
    assert out.shape == (B, N_ACTIONS)
    # bf16 operands (f32 accumulate) -> relaxed tolerance vs f32 reference;
    # outputs are bounded by |tanh * 0.01| <= 0.01.
    assert jnp.allclose(out, ref, atol=5e-4, rtol=2e-2), "mismatch vs reference (B=16)"

    # Ragged-batch sanity check (B not a multiple of the tile): OOB rows of the
    # partial tile are masked by Pallas and never contaminate kept rows.
    B2 = 5
    x2 = jax.random.normal(kx, (B2, FEATURE_NUM), jnp.float32)
    out2 = jax.block_until_ready(actor_forward(x2, w1_bf, b1, w2_bf, b2, w3_bf, b3))
    ref2 = reference_forward(x2, w1, b1, w2, b2, w3, b3)
    assert out2.shape == (B2, N_ACTIONS)
    assert jnp.allclose(out2, ref2, atol=5e-4, rtol=2e-2), "mismatch vs reference (B=5)"

    print("KERNEL_OK")
</pallas_src>

<mosaic_0001>
module attributes {stable_mosaic.version = 11 : i64} {
  func.func @actor_kernel(%arg0: i32, %arg1: memref<16x256xf32, #tpu.memory_space<vmem>>, %arg2: memref<256x512xbf16, #tpu.memory_space<vmem>>, %arg3: memref<1x512xf32, #tpu.memory_space<vmem>>, %arg4: memref<512x512xbf16, #tpu.memory_space<vmem>>, %arg5: memref<1x512xf32, #tpu.memory_space<vmem>>, %arg6: memref<512x128xbf16, #tpu.memory_space<vmem>>, %arg7: memref<1x128xf32, #tpu.memory_space<vmem>>, %arg8: memref<16x128xf32, #tpu.memory_space<vmem>>) attributes {dimension_semantics = [#tpu.dimension_semantics<parallel>], iteration_bounds = array<i64: 1>, scalar_prefetch = 0 : i64, scratch_operands = 0 : i64, tpu.core_type = #tpu.core_type<tc>, window_params = [{transform_indices = @transform_0, window_bounds = array<i64: 16, 256>}, {pipeline_mode = #tpu.pipeline_mode<synchronous>, transform_indices = @transform_1, window_bounds = array<i64: 256, 512>}, {pipeline_mode = #tpu.pipeline_mode<synchronous>, transform_indices = @transform_2, window_bounds = array<i64: 1, 512>}, {pipeline_mode = #tpu.pipeline_mode<synchronous>, transform_indices = @transform_3, window_bounds = array<i64: 512, 512>}, {pipeline_mode = #tpu.pipeline_mode<synchronous>, transform_indices = @transform_4, window_bounds = array<i64: 1, 512>}, {pipeline_mode = #tpu.pipeline_mode<synchronous>, transform_indices = @transform_5, window_bounds = array<i64: 512, 128>}, {pipeline_mode = #tpu.pipeline_mode<synchronous>, transform_indices = @transform_6, window_bounds = array<i64: 1, 128>}, {transform_indices = @transform_7, window_bounds = array<i64: 16, 128>}]} {
    %c0 = arith.constant 0 : index
    %c0_0 = arith.constant 0 : index
    %0 = vector.load %arg1[%c0, %c0_0] : memref<16x256xf32, #tpu.memory_space<vmem>>, vector<16x256xf32>
    %1 = arith.truncf %0 : vector<16x256xf32> to vector<16x256xbf16>
    %c0_1 = arith.constant 0 : index
    %c0_2 = arith.constant 0 : index
    %2 = vector.load %arg2[%c0_1, %c0_2] : memref<256x512xbf16, #tpu.memory_space<vmem>>, vector<256x512xbf16>
    %cst = arith.constant dense<0.000000e+00> : vector<16x512xf32>
    %3 = tpu.matmul %1, %2, %cst {dimension_numbers = #tpu.dot_dimension_numbers<[1], [0], [0], [1], [0, 0, 1, 1], [], []>} : vector<16x256xbf16>, vector<256x512xbf16>, vector<16x512xf32> -> vector<16x512xf32>
    %c0_3 = arith.constant 0 : index
    %c0_4 = arith.constant 0 : index
    %4 = vector.load %arg3[%c0_3, %c0_4] : memref<1x512xf32, #tpu.memory_space<vmem>>, vector<1x512xf32>
    %5 = vector.broadcast %4 : vector<1x512xf32> to vector<16x512xf32>
    %6 = arith.addf %3, %5 : vector<16x512xf32>
    %cst_5 = arith.constant 0.000000e+00 : f32
    %7 = vector.broadcast %cst_5 : f32 to vector<16x512xf32>
    %8 = arith.maximumf %6, %7 : vector<16x512xf32>
    %9 = arith.truncf %8 : vector<16x512xf32> to vector<16x512xbf16>
    %c0_6 = arith.constant 0 : index
    %c0_7 = arith.constant 0 : index
    %10 = vector.load %arg4[%c0_6, %c0_7] : memref<512x512xbf16, #tpu.memory_space<vmem>>, vector<512x512xbf16>
    %cst_8 = arith.constant dense<0.000000e+00> : vector<16x512xf32>
    %11 = tpu.matmul %9, %10, %cst_8 {dimension_numbers = #tpu.dot_dimension_numbers<[1], [0], [0], [1], [0, 0, 1, 1], [], []>} : vector<16x512xbf16>, vector<512x512xbf16>, vector<16x512xf32> -> vector<16x512xf32>
    %c0_9 = arith.constant 0 : index
    %c0_10 = arith.constant 0 : index
    %12 = vector.load %arg5[%c0_9, %c0_10] : memref<1x512xf32, #tpu.memory_space<vmem>>, vector<1x512xf32>
    %13 = vector.broadcast %12 : vector<1x512xf32> to vector<16x512xf32>
    %14 = arith.addf %11, %13 : vector<16x512xf32>
    %cst_11 = arith.constant 0.000000e+00 : f32
    %15 = vector.broadcast %cst_11 : f32 to vector<16x512xf32>
    %16 = arith.maximumf %14, %15 : vector<16x512xf32>
    %17 = arith.truncf %16 : vector<16x512xf32> to vector<16x512xbf16>
    %c0_12 = arith.constant 0 : index
    %c0_13 = arith.constant 0 : index
    %18 = vector.load %arg6[%c0_12, %c0_13] : memref<512x128xbf16, #tpu.memory_space<vmem>>, vector<512x128xbf16>
    %cst_14 = arith.constant dense<0.000000e+00> : vector<16x128xf32>
    %19 = tpu.matmul %17, %18, %cst_14 {dimension_numbers = #tpu.dot_dimension_numbers<[1], [0], [0], [1], [0, 0, 1, 1], [], []>} : vector<16x512xbf16>, vector<512x128xbf16>, vector<16x128xf32> -> vector<16x128xf32>
    %c0_15 = arith.constant 0 : index
    %c0_16 = arith.constant 0 : index
    %20 = vector.load %arg7[%c0_15, %c0_16] : memref<1x128xf32, #tpu.memory_space<vmem>>, vector<1x128xf32>
    %21 = vector.broadcast %20 : vector<1x128xf32> to vector<16x128xf32>
    %22 = arith.addf %19, %21 : vector<16x128xf32>
    %23 = math.tanh %22 : vector<16x128xf32>
    %cst_17 = arith.constant 0.00999999977 : f32
    %24 = vector.broadcast %cst_17 : f32 to vector<16x128xf32>
    %25 = arith.mulf %23, %24 : vector<16x128xf32>
    %c0_18 = arith.constant 0 : index
    %c0_19 = arith.constant 0 : index
    %26 = vector.load %arg8[%c0_18, %c0_19] : memref<16x128xf32, #tpu.memory_space<vmem>>, vector<16x128xf32>
    tpu.vector_store %arg8[%c0_18, %c0_19], %25 {strides = array<i32>} : memref<16x128xf32, #tpu.memory_space<vmem>>, vector<16x128xf32>,
    return
  }
  func.func @transform_0(%arg0: i32) -> (i32, i32) {
    %c0_i32 = arith.constant 0 : i32
    %c0_i32_0 = arith.constant 0 : i32
    return %arg0, %c0_i32 : i32, i32
  }
  func.func @transform_1(%arg0: i32) -> (i32, i32) {
    %c0_i32 = arith.constant 0 : i32
    %c0_i32_0 = arith.constant 0 : i32
    %c0_i32_1 = arith.constant 0 : i32
    return %c0_i32, %c0_i32_0 : i32, i32
  }
  func.func @transform_2(%arg0: i32) -> (i32, i32) {
    %c0_i32 = arith.constant 0 : i32
    %c0_i32_0 = arith.constant 0 : i32
    %c0_i32_1 = arith.constant 0 : i32
    return %c0_i32, %c0_i32_0 : i32, i32
  }
  func.func @transform_3(%arg0: i32) -> (i32, i32) {
    %c0_i32 = arith.constant 0 : i32
    %c0_i32_0 = arith.constant 0 : i32
    %c0_i32_1 = arith.constant 0 : i32
    return %c0_i32, %c0_i32_0 : i32, i32
  }
  func.func @transform_4(%arg0: i32) -> (i32, i32) {
    %c0_i32 = arith.constant 0 : i32
    %c0_i32_0 = arith.constant 0 : i32
    %c0_i32_1 = arith.constant 0 : i32
    return %c0_i32, %c0_i32_0 : i32, i32
  }
  func.func @transform_5(%arg0: i32) -> (i32, i32) {
    %c0_i32 = arith.constant 0 : i32
    %c0_i32_0 = arith.constant 0 : i32
    %c0_i32_1 = arith.constant 0 : i32
    return %c0_i32, %c0_i32_0 : i32, i32
  }
  func.func @transform_6(%arg0: i32) -> (i32, i32) {
    %c0_i32 = arith.constant 0 : i32
    %c0_i32_0 = arith.constant 0 : i32
    %c0_i32_1 = arith.constant 0 : i32
    return %c0_i32, %c0_i32_0 : i32, i32
  }
  func.func @transform_7(%arg0: i32) -> (i32, i32) {
    %c0_i32 = arith.constant 0 : i32
    %c0_i32_0 = arith.constant 0 : i32
    return %arg0, %c0_i32 : i32, i32
  }
}

</mosaic_0001>

<llo_original>
// kernel: actor_forward.1
$region0: #{actor_forward.1}
  #allocation0 [shape = 'u32[]', space=smem, size = 0x4, offset = 0x4, fixed_abs, tag = 'smem constant byte address 0x4 - core index']
  #allocation1 [shape = 'u32[72,128]{1,0:T(1,128)}', space=vmem, size = 0x9000, scoped, tag = 'internal scratch']
  %s0 = inlined_call_operand.hbm [shape: f32[16,256], index: 0, kind: input, shape index: {}]
  %s1 = inlined_call_operand.hbm [shape: bf16[256,512], index: 1, kind: input, shape index: {}]
  %s2 = inlined_call_operand.hbm [shape: f32[1,512], index: 2, kind: input, shape index: {}]
  %s3 = inlined_call_operand.hbm [shape: bf16[512,512], index: 3, kind: input, shape index: {}]
  %s4 = inlined_call_operand.hbm [shape: f32[1,512], index: 4, kind: input, shape index: {}]
  %s5 = inlined_call_operand.hbm [shape: bf16[512,128], index: 5, kind: input, shape index: {}]
  %s6 = inlined_call_operand.vmem [shape: f32[1,128], index: 6, kind: input, shape index: {}]
  %s7 = inlined_call_operand.hbm [shape: f32[16,128], index: 7, kind: output, shape index: {}]
  %s8 = sld [smem:[#allocation0]]
  $region62: #{actor_forward.1} parent=0
    _
  %s10 = ssub.s32 1, %s8
  %s11 = scalar_select 0, %s10, %s8
  $region1: #{actor_forward.1} parent=0
    #allocation2 [shape = 'u8[16384]{0}', space=vmem, size = 0x4000, scoped, tag = 'input window, operand 0, single buffered']
    #allocation3 [shape = 's32[1]{0}', space=sflag, size = 0x4, scoped, tag = 'scoped memory for actor_forward.1']
    #allocation4 [shape = 's32[1]{0}', space=sflag, size = 0x4, scoped, tag = 'scoped memory for actor_forward.1']
    #allocation5 [shape = 'u8[262144]{0}', space=vmem, size = 0x40000, scoped, tag = 'input window, operand 1, single buffered']
    #allocation6 [shape = 's32[1]{0}', space=sflag, size = 0x4, scoped, tag = 'scoped memory for actor_forward.1']
    #allocation7 [shape = 'u8[2048]{0}', space=vmem, size = 0x800, scoped, tag = 'input window, operand 2, single buffered']
    #allocation8 [shape = 'u8[524288]{0}', space=vmem, size = 0x80000, scoped, tag = 'input window, operand 3, single buffered']
    #allocation9 [shape = 's32[1]{0}', space=sflag, size = 0x4, scoped, tag = 'scoped memory for actor_forward.1']
    #allocation10 [shape = 'u8[2048]{0}', space=vmem, size = 0x800, scoped, tag = 'input window, operand 4, single buffered']
    #allocation11 [shape = 'u8[131072]{0}', space=vmem, size = 0x20000, scoped, tag = 'input window, operand 5, single buffered']
    #allocation12 [shape = 's32[1]{0}', space=sflag, size = 0x4, scoped, tag = 'scoped memory for actor_forward.1']
    #allocation13 [shape = 'u8[8192]{0}', space=vmem, size = 0x2000, scoped, tag = 'output window, operand 0, single buffered']
    %12 = vsyncpa [#allocation3], 0
    %13 = vsyncpa [#allocation6], 0
    %14 = vsyncpa [#allocation9], 0
    %15 = vsyncpa [#allocation12], 0
    %16 = vsyncpa [#allocation4], 0
    // Predicated region
    $region2: #{actor_forward.1} parent=1 // pred_check
      _
    $region3: #{actor_forward.1} parent=1 // pred_check_branch
      %18 = sbr.rel (0) target = $region5
    $region4: #{actor_forward.1} parent=1 // pred_region
      %20 = vsyncadd [#allocation3], 0
      %s21 = sshll.u32 %s0, 4
      %s22 = int_to_ptr.hbm [resolvable:$true] %s21
      %s23 = sshll.u32 [#allocation2], 4
      %s24 = int_to_ptr.vmem [resolvable:$true] %s23
      %29 = dma.hbm_to_vmem [thread:$0]  %s22, 512, %s24, [#allocation3], 256, 256, 16
    $region5: #{actor_forward.1} parent=1 // pred_fallthru
      _
    // Predicated region
    $region6: #{actor_forward.1} parent=1 // pred_check
      _
    $region7: #{actor_forward.1} parent=1 // pred_check_branch
      %31 = sbr.rel (0) target = $region9
    $region8: #{actor_forward.1} parent=1 // pred_region
      %33 = vsyncadd [#allocation6], 0
      %s34 = sshll.u32 %s1, 4
      %s35 = int_to_ptr.hbm [resolvable:$true] %s34
      %s36 = sshll.u32 [#allocation5], 4
      %s37 = int_to_ptr.vmem [resolvable:$true] %s36
      %42 = dma.hbm_to_vmem [thread:$0]  %s35, 8192, %s37, [#allocation6], 256, 256, 16
    $region9: #{actor_forward.1} parent=1 // pred_fallthru
      _
    // Predicated region
    $region10: #{actor_forward.1} parent=1 // pred_check
      _
    $region11: #{actor_forward.1} parent=1 // pred_check_branch
      %44 = sbr.rel (0) target = $region13
    $region12: #{actor_forward.1} parent=1 // pred_region
      %46 = vsyncadd [#allocation6], 0
      %s48 = sshll.u32 %s2, 4
      %s49 = int_to_ptr.hbm [resolvable:$true] %s48
      %s50 = sshll.u32 [#allocation7], 4
      %s51 = int_to_ptr.vmem [resolvable:$true] %s50
      %53 = dma.hbm_to_vmem [thread:$0]  %s49, 64, %s51, [#allocation6]
    $region13: #{actor_forward.1} parent=1 // pred_fallthru
      _
    // Predicated region
    $region14: #{actor_forward.1} parent=1 // pred_check
      _
    $region15: #{actor_forward.1} parent=1 // pred_check_branch
      %55 = sbr.rel (0) target = $region17
    $region16: #{actor_forward.1} parent=1 // pred_region
      %57 = vsyncadd [#allocation9], 0
      %s58 = sshll.u32 %s3, 4
      %s59 = int_to_ptr.hbm [resolvable:$true] %s58
      %s60 = sshll.u32 [#allocation8], 4
      %s61 = int_to_ptr.vmem [resolvable:$true] %s60
      %66 = dma.hbm_to_vmem [thread:$0]  %s59, 16384, %s61, [#allocation9], 256, 256, 16
    $region17: #{actor_forward.1} parent=1 // pred_fallthru
      _
    // Predicated region
    $region18: #{actor_forward.1} parent=1 // pred_check
      _
    $region19: #{actor_forward.1} parent=1 // pred_check_branch
      %68 = sbr.rel (0) target = $region21
    $region20: #{actor_forward.1} parent=1 // pred_region
      %70 = vsyncadd [#allocation9], 0
      %s72 = sshll.u32 %s4, 4
      %s73 = int_to_ptr.hbm [resolvable:$true] %s72
      %s74 = sshll.u32 [#allocation10], 4
      %s75 = int_to_ptr.vmem [resolvable:$true] %s74
      %77 = dma.hbm_to_vmem [thread:$0]  %s73, 64, %s75, [#allocation9]
    $region21: #{actor_forward.1} parent=1 // pred_fallthru
      _
    // Predicated region
    $region22: #{actor_forward.1} parent=1 // pred_check
      _
    $region23: #{actor_forward.1} parent=1 // pred_check_branch
      %79 = sbr.rel (0) target = $region25
    $region24: #{actor_forward.1} parent=1 // pred_region
      %81 = vsyncadd [#allocation12], 0
      %s82 = sshll.u32 %s5, 4
      %s83 = int_to_ptr.hbm [resolvable:$true] %s82
      %s84 = sshll.u32 [#allocation11], 4
      %s85 = int_to_ptr.vmem [resolvable:$true] %s84
      %90 = dma.hbm_to_vmem [thread:$0]  %s83, 4096, %s85, [#allocation12], 64, 64, 4
    $region25: #{actor_forward.1} parent=1 // pred_fallthru
      _
    // Predicated region
    $region26: #{actor_forward.1} parent=1 // pred_check
      _
    $region27: #{actor_forward.1} parent=1 // pred_check_branch
      %92 = sbr.rel (0) target = $region29
    $region28: #{actor_forward.1} parent=1 // pred_region
      _
    $region29: #{actor_forward.1} parent=1 // pred_fallthru
      _
    // Predicated region
    $region30: #{actor_forward.1} parent=1 // pred_check
      _
    $region31: #{actor_forward.1} parent=1 // pred_check_branch
      %94 = sbr.rel (0) target = $region33
    $region32: #{actor_forward.1} parent=1 // pred_region
      %96 = dma.done [#allocation3], 512
    $region33: #{actor_forward.1} parent=1 // pred_fallthru
      _
    // Predicated region
    $region34: #{actor_forward.1} parent=1 // pred_check
      _
    $region35: #{actor_forward.1} parent=1 // pred_check_branch
      %98 = sbr.rel (0) target = $region37
    $region36: #{actor_forward.1} parent=1 // pred_region
      %100 = dma.done [#allocation6], 8192
    $region37: #{actor_forward.1} parent=1 // pred_fallthru
      _
    // Predicated region
    $region38: #{actor_forward.1} parent=1 // pred_check
      _
    $region39: #{actor_forward.1} parent=1 // pred_check_branch
      %102 = sbr.rel (0) target = $region41
    $region40: #{actor_forward.1} parent=1 // pred_region
      %104 = dma.done [#allocation6], 64
    $region41: #{actor_forward.1} parent=1 // pred_fallthru
      _
    // Predicated region
    $region42: #{actor_forward.1} parent=1 // pred_check
      _
    $region43: #{actor_forward.1} parent=1 // pred_check_branch
      %106 = sbr.rel (0) target = $region45
    $region44: #{actor_forward.1} parent=1 // pred_region
      %108 = dma.done [#allocation9], 16384
    $region45: #{actor_forward.1} parent=1 // pred_fallthru
      _
    // Predicated region
    $region46: #{actor_forward.1} parent=1 // pred_check
      _
    $region47: #{actor_forward.1} parent=1 // pred_check_branch
      %110 = sbr.rel (0) target = $region49
    $region48: #{actor_forward.1} parent=1 // pred_region
      %112 = dma.done [#allocation9], 64
    $region49: #{actor_forward.1} parent=1 // pred_fallthru
      _
    // Predicated region
    $region50: #{actor_forward.1} parent=1 // pred_check
      _
    $region51: #{actor_forward.1} parent=1 // pred_check_branch
      %114 = sbr.rel (0) target = $region53
    $region52: #{actor_forward.1} parent=1 // pred_region
      %116 = dma.done [#allocation12], 4096
    $region53: #{actor_forward.1} parent=1 // pred_fallthru
      _
    %v117 = vld [vmem:[#allocation2] sm:$0xff]
    %v118 = vld [vmem:[#allocation2 + $0x8] sm:$0xff]
    %v119 = vld [vmem:[#allocation2 + $0x10] sm:$0xff]
    %v120 = vld [vmem:[#allocation2 + $0x18] sm:$0xff]
    %v121 = vpack.c.bf16 %v119, %v117
    %v122 = vpack.c.bf16 %v120, %v118
    %v123 = vld [vmem:[#allocation5] sm:$0xff]
    %v124 = vld [vmem:[#allocation5 + $0x8] sm:$0xff]
    %v125 = vld [vmem:[#allocation5 + $0x10] sm:$0xff]
    %v126 = vld [vmem:[#allocation5 + $0x18] sm:$0xff]
    %v127 = vld [vmem:[#allocation5 + $0x20] sm:$0xff]
    %v128 = vld [vmem:[#allocation5 + $0x28] sm:$0xff]
    %v129 = vld [vmem:[#allocation5 + $0x30] sm:$0xff]
    %v130 = vld [vmem:[#allocation5 + $0x38] sm:$0xff]
    %v131 = vld [vmem:[#allocation5 + $0x40] sm:$0xff]
    %v132 = vld [vmem:[#allocation5 + $0x48] sm:$0xff]
    %v133 = vld [vmem:[#allocation5 + $0x50] sm:$0xff]
    %v134 = vld [vmem:[#allocation5 + $0x58] sm:$0xff]
    %v135 = vld [vmem:[#allocation5 + $0x60] sm:$0xff]
    %v136 = vld [vmem:[#allocation5 + $0x68] sm:$0xff]
    %v137 = vld [vmem:[#allocation5 + $0x70] sm:$0xff]
    %v138 = vld [vmem:[#allocation5 + $0x78] sm:$0xff]
    %v139 = vld [vmem:[#allocation5 + $0x80] sm:$0xff]
    %v140 = vld [vmem:[#allocation5 + $0x88] sm:$0xff]
    %v141 = vld [vmem:[#allocation5 + $0x90] sm:$0xff]
    %v142 = vld [vmem:[#allocation5 + $0x98] sm:$0xff]
    %v143 = vld [vmem:[#allocation5 + $0xa0] sm:$0xff]
    %v144 = vld [vmem:[#allocation5 + $0xa8] sm:$0xff]
    %v145 = vld [vmem:[#allocation5 + $0xb0] sm:$0xff]
    %v146 = vld [vmem:[#allocation5 + $0xb8] sm:$0xff]
    %v147 = vld [vmem:[#allocation5 + $0xc0] sm:$0xff]
    %v148 = vld [vmem:[#allocation5 + $0xc8] sm:$0xff]
    %v149 = vld [vmem:[#allocation5 + $0xd0] sm:$0xff]
    %v150 = vld [vmem:[#allocation5 + $0xd8] sm:$0xff]
    %v151 = vld [vmem:[#allocation5 + $0xe0] sm:$0xff]
    %v152 = vld [vmem:[#allocation5 + $0xe8] sm:$0xff]
    %v153 = vld [vmem:[#allocation5 + $0xf0] sm:$0xff]
    %v154 = vld [vmem:[#allocation5 + $0xf8] sm:$0xff]
    %v155 = vld [vmem:[#allocation5 + $0x100] sm:$0xff]
    %v156 = vld [vmem:[#allocation5 + $0x108] sm:$0xff]
    %v157 = vld [vmem:[#allocation5 + $0x110] sm:$0xff]
    %v158 = vld [vmem:[#allocation5 + $0x118] sm:$0xff]
    %v159 = vld [vmem:[#allocation5 + $0x120] sm:$0xff]
    %v160 = vld [vmem:[#allocation5 + $0x128] sm:$0xff]
    %v161 = vld [vmem:[#allocation5 + $0x130] sm:$0xff]
    %v162 = vld [vmem:[#allocation5 + $0x138] sm:$0xff]
    %v163 = vld [vmem:[#allocation5 + $0x140] sm:$0xff]
    %v164 = vld [vmem:[#allocation5 + $0x148] sm:$0xff]
    %v165 = vld [vmem:[#allocation5 + $0x150] sm:$0xff]
    %v166 = vld [vmem:[#allocation5 + $0x158] sm:$0xff]
    %v167 = vld [vmem:[#allocation5 + $0x160] sm:$0xff]
    %v168 = vld [vmem:[#allocation5 + $0x168] sm:$0xff]
    %v169 = vld [vmem:[#allocation5 + $0x170] sm:$0xff]
    %v170 = vld [vmem:[#allocation5 + $0x178] sm:$0xff]
    %v171 = vld [vmem:[#allocation5 + $0x180] sm:$0xff]
    %v172 = vld [vmem:[#allocation5 + $0x188] sm:$0xff]
    %v173 = vld [vmem:[#allocation5 + $0x190] sm:$0xff]
    %v174 = vld [vmem:[#allocation5 + $0x198] sm:$0xff]
    %v175 = vld [vmem:[#allocation5 + $0x1a0] sm:$0xff]
    %v176 = vld [vmem:[#allocation5 + $0x1a8] sm:$0xff]
    %v177 = vld [vmem:[#allocation5 + $0x1b0] sm:$0xff]
    %v178 = vld [vmem:[#allocation5 + $0x1b8] sm:$0xff]
    %v179 = vld [vmem:[#allocation5 + $0x1c0] sm:$0xff]
    %v180 = vld [vmem:[#allocation5 + $0x1c8] sm:$0xff]
    %v181 = vld [vmem:[#allocation5 + $0x1d0] sm:$0xff]
    %v182 = vld [vmem:[#allocation5 + $0x1d8] sm:$0xff]
    %v183 = vld [vmem:[#allocation5 + $0x1e0] sm:$0xff]
    %v184 = vld [vmem:[#allocation5 + $0x1e8] sm:$0xff]
    %v185 = vld [vmem:[#allocation5 + $0x1f0] sm:$0xff]
    %v186 = vld [vmem:[#allocation5 + $0x1f8] sm:$0xff]
    %v187 = vld [vmem:[#allocation7] sm:$0xf]
    %v189 = vperm.slane %v187, 0
    %v190 = vperm.slane %v187, 1
    %v191 = vperm.slane %v187, 2
    %v192 = vperm.slane %v187, 3
    %v261 = vunpack.c.l.b16 %v123
    %v262 = vunpack.c.h.b16 %v123
    %v263 = vunpack.c.l.b16 %v124
    %v264 = vunpack.c.h.b16 %v124
    %v265 = vunpack.c.l.b16 %v125
    %v266 = vunpack.c.h.b16 %v125
    %v267 = vunpack.c.l.b16 %v126
    %v268 = vunpack.c.h.b16 %v126
    %v269 = vunpack.c.l.b16 %v127
    %v270 = vunpack.c.h.b16 %v127
    %v271 = vunpack.c.l.b16 %v128
    %v272 = vunpack.c.h.b16 %v128
    %v273 = vunpack.c.l.b16 %v129
    %v274 = vunpack.c.h.b16 %v129
    %v275 = vunpack.c.l.b16 %v130
    %v276 = vunpack.c.h.b16 %v130
    %v277 = vunpack.c.l.b16 %v131
    %v278 = vunpack.c.h.b16 %v131
    %v279 = vunpack.c.l.b16 %v132
    %v280 = vunpack.c.h.b16 %v132
    %v281 = vunpack.c.l.b16 %v133
    %v282 = vunpack.c.h.b16 %v133
    %v283 = vunpack.c.l.b16 %v134
    %v284 = vunpack.c.h.b16 %v134
    %v285 = vunpack.c.l.b16 %v135
    %v286 = vunpack.c.h.b16 %v135
    %v287 = vunpack.c.l.b16 %v136
    %v288 = vunpack.c.h.b16 %v136
    %v289 = vunpack.c.l.b16 %v137
    %v290 = vunpack.c.h.b16 %v137
    %v291 = vunpack.c.l.b16 %v138
    %v292 = vunpack.c.h.b16 %v138
    %v293 = vunpack.c.l.b16 %v139
    %v294 = vunpack.c.h.b16 %v139
    %v295 = vunpack.c.l.b16 %v140
    %v296 = vunpack.c.h.b16 %v140
    %v297 = vunpack.c.l.b16 %v141
    %v298 = vunpack.c.h.b16 %v141
    %v299 = vunpack.c.l.b16 %v142
    %v300 = vunpack.c.h.b16 %v142
    %v301 = vunpack.c.l.b16 %v143
    %v302 = vunpack.c.h.b16 %v143
    %v303 = vunpack.c.l.b16 %v144
    %v304 = vunpack.c.h.b16 %v144
    %v305 = vunpack.c.l.b16 %v145
    %v306 = vunpack.c.h.b16 %v145
    %v307 = vunpack.c.l.b16 %v146
    %v308 = vunpack.c.h.b16 %v146
    %v309 = vunpack.c.l.b16 %v147
    %v310 = vunpack.c.h.b16 %v147
    %v311 = vunpack.c.l.b16 %v148
    %v312 = vunpack.c.h.b16 %v148
    %v313 = vunpack.c.l.b16 %v149
    %v314 = vunpack.c.h.b16 %v149
    %v315 = vunpack.c.l.b16 %v150
    %v316 = vunpack.c.h.b16 %v150
    %v317 = vunpack.c.l.b16 %v151
    %v318 = vunpack.c.h.b16 %v151
    %v319 = vunpack.c.l.b16 %v152
    %v320 = vunpack.c.h.b16 %v152
    %v321 = vunpack.c.l.b16 %v153
    %v322 = vunpack.c.h.b16 %v153
    %v323 = vunpack.c.l.b16 %v154
    %v324 = vunpack.c.h.b16 %v154
    %v325 = vunpack.c.l.b16 %v155
    %v326 = vunpack.c.h.b16 %v155
    %v327 = vunpack.c.l.b16 %v156
    %v328 = vunpack.c.h.b16 %v156
    %v329 = vunpack.c.l.b16 %v157
    %v330 = vunpack.c.h.b16 %v157
    %v331 = vunpack.c.l.b16 %v158
    %v332 = vunpack.c.h.b16 %v158
    %v333 = vunpack.c.l.b16 %v159
    %v334 = vunpack.c.h.b16 %v159
    %v335 = vunpack.c.l.b16 %v160
    %v336 = vunpack.c.h.b16 %v160
    %v337 = vunpack.c.l.b16 %v161
    %v338 = vunpack.c.h.b16 %v161
    %v339 = vunpack.c.l.b16 %v162
    %v340 = vunpack.c.h.b16 %v162
    %v341 = vunpack.c.l.b16 %v163
    %v342 = vunpack.c.h.b16 %v163
    %v343 = vunpack.c.l.b16 %v164
    %v344 = vunpack.c.h.b16 %v164
    %v345 = vunpack.c.l.b16 %v165
    %v346 = vunpack.c.h.b16 %v165
    %v347 = vunpack.c.l.b16 %v166
    %v348 = vunpack.c.h.b16 %v166
    %v349 = vunpack.c.l.b16 %v167
    %v350 = vunpack.c.h.b16 %v167
    %v351 = vunpack.c.l.b16 %v168
    %v352 = vunpack.c.h.b16 %v168
    %v353 = vunpack.c.l.b16 %v169
    %v354 = vunpack.c.h.b16 %v169
    %v355 = vunpack.c.l.b16 %v170
    %v356 = vunpack.c.h.b16 %v170
    %v357 = vunpack.c.l.b16 %v171
    %v358 = vunpack.c.h.b16 %v171
    %v359 = vunpack.c.l.b16 %v172
    %v360 = vunpack.c.h.b16 %v172
    %v361 = vunpack.c.l.b16 %v173
    %v362 = vunpack.c.h.b16 %v173
    %v363 = vunpack.c.l.b16 %v174
    %v364 = vunpack.c.h.b16 %v174
    %v365 = vunpack.c.l.b16 %v175
    %v366 = vunpack.c.h.b16 %v175
    %v367 = vunpack.c.l.b16 %v176
    %v368 = vunpack.c.h.b16 %v176
    %v369 = vunpack.c.l.b16 %v177
    %v370 = vunpack.c.h.b16 %v177
    %v371 = vunpack.c.l.b16 %v178
    %v372 = vunpack.c.h.b16 %v178
    %v373 = vunpack.c.l.b16 %v179
    %v374 = vunpack.c.h.b16 %v179
    %v375 = vunpack.c.l.b16 %v180
    %v376 = vunpack.c.h.b16 %v180
    %v377 = vunpack.c.l.b16 %v181
    %v378 = vunpack.c.h.b16 %v181
    %v379 = vunpack.c.l.b16 %v182
    %v380 = vunpack.c.h.b16 %v182
    %v381 = vunpack.c.l.b16 %v183
    %v382 = vunpack.c.h.b16 %v183
    %v383 = vunpack.c.l.b16 %v184
    %v384 = vunpack.c.h.b16 %v184
    %v385 = vunpack.c.l.b16 %v185
    %v386 = vunpack.c.h.b16 %v185
    %v387 = vunpack.c.l.b16 %v186
    %v388 = vunpack.c.h.b16 %v186
    %v389 = vpack.c.b16 %v265, %v261
    %v390 = vpack.c.b16 %v266, %v262
    %v391 = vpack.c.b16 %v267, %v263
    %v392 = vpack.c.b16 %v268, %v264
    %v393 = vpack.c.b16 %v273, %v269
    %v394 = vpack.c.b16 %v274, %v270
    %v395 = vpack.c.b16 %v275, %v271
    %v396 = vpack.c.b16 %v276, %v272
    %v397 = vpack.c.b16 %v281, %v277
    %v398 = vpack.c.b16 %v282, %v278
    %v399 = vpack.c.b16 %v283, %v279
    %v400 = vpack.c.b16 %v284, %v280
    %v401 = vpack.c.b16 %v289, %v285
    %v402 = vpack.c.b16 %v290, %v286
    %v403 = vpack.c.b16 %v291, %v287
    %v404 = vpack.c.b16 %v292, %v288
    %v405 = vpack.c.b16 %v297, %v293
    %v406 = vpack.c.b16 %v298, %v294
    %v407 = vpack.c.b16 %v299, %v295
    %v408 = vpack.c.b16 %v300, %v296
    %v409 = vpack.c.b16 %v305, %v301
    %v410 = vpack.c.b16 %v306, %v302
    %v411 = vpack.c.b16 %v307, %v303
    %v412 = vpack.c.b16 %v308, %v304
    %v413 = vpack.c.b16 %v313, %v309
    %v414 = vpack.c.b16 %v314, %v310
    %v415 = vpack.c.b16 %v315, %v311
    %v416 = vpack.c.b16 %v316, %v312
    %v417 = vpack.c.b16 %v321, %v317
    %v418 = vpack.c.b16 %v322, %v318
    %v419 = vpack.c.b16 %v323, %v319
    %v420 = vpack.c.b16 %v324, %v320
    %v421 = vpack.c.b16 %v329, %v325
    %v422 = vpack.c.b16 %v330, %v326
    %v423 = vpack.c.b16 %v331, %v327
    %v424 = vpack.c.b16 %v332, %v328
    %v425 = vpack.c.b16 %v337, %v333
    %v426 = vpack.c.b16 %v338, %v334
    %v427 = vpack.c.b16 %v339, %v335
    %v428 = vpack.c.b16 %v340, %v336
    %v429 = vpack.c.b16 %v345, %v341
    %v430 = vpack.c.b16 %v346, %v342
    %v431 = vpack.c.b16 %v347, %v343
    %v432 = vpack.c.b16 %v348, %v344
    %v433 = vpack.c.b16 %v353, %v349
    %v434 = vpack.c.b16 %v354, %v350
    %v435 = vpack.c.b16 %v355, %v351
    %v436 = vpack.c.b16 %v356, %v352
    %v437 = vpack.c.b16 %v361, %v357
    %v438 = vpack.c.b16 %v362, %v358
    %v439 = vpack.c.b16 %v363, %v359
    %v440 = vpack.c.b16 %v364, %v360
    %v441 = vpack.c.b16 %v369, %v365
    %v442 = vpack.c.b16 %v370, %v366
    %v443 = vpack.c.b16 %v371, %v367
    %v444 = vpack.c.b16 %v372, %v368
    %v445 = vpack.c.b16 %v377, %v373
    %v446 = vpack.c.b16 %v378, %v374
    %v447 = vpack.c.b16 %v379, %v375
    %v448 = vpack.c.b16 %v380, %v376
    %v449 = vpack.c.b16 %v385, %v381
    %v450 = vpack.c.b16 %v386, %v382
    %v451 = vpack.c.b16 %v387, %v383
    %v452 = vpack.c.b16 %v388, %v384
    %517 = vmatpush.bf16.msra.mxu0 %v417
    %518 = vmatpush.bf16.msra.mxu0 %v413
    %519 = vmatpush.bf16.msra.mxu0 %v409
    %520 = vmatpush.bf16.msra.mxu0 %v405
    %521 = vmatpush.bf16.msra.mxu0 %v401
    %522 = vmatpush.bf16.msra.mxu0 %v397
    %523 = vmatpush.bf16.msra.mxu0 %v393
    %524 = vmatpush.bf16.msra.mxu0 %v389
    %525 = vmatmul.bf16.gmra.mxu0 %v121
    %v526 = vpop.f32.mrf.mxu0
    %v527 = vadd.f32 %v189, %v526
    %v528 = vpop.f32.mrf.mxu0
    %v529 = vadd.f32 %v189, %v528
    %530 = vdwg.mxu0
    %531 = vmatpush.bf16.msra.mxu0 %v449
    %532 = vmatpush.bf16.msra.mxu0 %v445
    %533 = vmatpush.bf16.msra.mxu0 %v441
    %534 = vmatpush.bf16.msra.mxu0 %v437
    %535 = vmatpush.bf16.msra.mxu0 %v433
    %536 = vmatpush.bf16.msra.mxu0 %v429
    %537 = vmatpush.bf16.msra.mxu0 %v425
    %538 = vmatpush.bf16.msra.mxu0 %v421
    %539 = vmatmul.bf16.gmra.mxu0 %v122
    %v540 = vpop.f32.mrf.mxu0
    %v541 = vadd.f32 %v527, %v540
    %v542 = vpop.f32.mrf.mxu0
    %v543 = vadd.f32 %v529, %v542
    %544 = vdwg.mxu0
    %545 = vmatpush.bf16.msra.mxu0 %v418
    %546 = vmatpush.bf16.msra.mxu0 %v414
    %547 = vmatpush.bf16.msra.mxu0 %v410
    %548 = vmatpush.bf16.msra.mxu0 %v406
    %549 = vmatpush.bf16.msra.mxu0 %v402
    %550 = vmatpush.bf16.msra.mxu0 %v398
    %551 = vmatpush.bf16.msra.mxu0 %v394
    %552 = vmatpush.bf16.msra.mxu0 %v390
    %553 = vmatmul.bf16.gmra.mxu0 %v121
    %v554 = vpop.f32.mrf.mxu0
    %v555 = vadd.f32 %v190, %v554
    %v556 = vpop.f32.mrf.mxu0
    %v557 = vadd.f32 %v190, %v556
    %558 = vdwg.mxu0
    %559 = vmatpush.bf16.msra.mxu0 %v450
    %560 = vmatpush.bf16.msra.mxu0 %v446
    %561 = vmatpush.bf16.msra.mxu0 %v442
    %562 = vmatpush.bf16.msra.mxu0 %v438
    %563 = vmatpush.bf16.msra.mxu0 %v434
    %564 = vmatpush.bf16.msra.mxu0 %v430
    %565 = vmatpush.bf16.msra.mxu0 %v426
    %566 = vmatpush.bf16.msra.mxu0 %v422
    %567 = vmatmul.bf16.gmra.mxu0 %v122
    %v568 = vpop.f32.mrf.mxu0
    %v569 = vadd.f32 %v555, %v568
    %v570 = vpop.f32.mrf.mxu0
    %v571 = vadd.f32 %v557, %v570
    %572 = vdwg.mxu0
    %573 = vmatpush.bf16.msra.mxu0 %v419
    %574 = vmatpush.bf16.msra.mxu0 %v415
    %575 = vmatpush.bf16.msra.mxu0 %v411
    %576 = vmatpush.bf16.msra.mxu0 %v407
    %577 = vmatpush.bf16.msra.mxu0 %v403
    %578 = vmatpush.bf16.msra.mxu0 %v399
    %579 = vmatpush.bf16.msra.mxu0 %v395
    %580 = vmatpush.bf16.msra.mxu0 %v391
    %581 = vmatmul.bf16.gmra.mxu0 %v121
    %v582 = vpop.f32.mrf.mxu0
    %v583 = vadd.f32 %v191, %v582
    %v584 = vpop.f32.mrf.mxu0
    %v585 = vadd.f32 %v191, %v584
    %586 = vdwg.mxu0
    %587 = vmatpush.bf16.msra.mxu0 %v451
    %588 = vmatpush.bf16.msra.mxu0 %v447
    %589 = vmatpush.bf16.msra.mxu0 %v443
    %590 = vmatpush.bf16.msra.mxu0 %v439
    %591 = vmatpush.bf16.msra.mxu0 %v435
    %592 = vmatpush.bf16.msra.mxu0 %v431
    %593 = vmatpush.bf16.msra.mxu0 %v427
    %594 = vmatpush.bf16.msra.mxu0 %v423
    %595 = vmatmul.bf16.gmra.mxu0 %v122
    %v596 = vpop.f32.mrf.mxu0
    %v597 = vadd.f32 %v583, %v596
    %v598 = vpop.f32.mrf.mxu0
    %v599 = vadd.f32 %v585, %v598
    %600 = vdwg.mxu0
    %601 = vmatpush.bf16.msra.mxu0 %v420
    %602 = vmatpush.bf16.msra.mxu0 %v416
    %603 = vmatpush.bf16.msra.mxu0 %v412
    %604 = vmatpush.bf16.msra.mxu0 %v408
    %605 = vmatpush.bf16.msra.mxu0 %v404
    %606 = vmatpush.bf16.msra.mxu0 %v400
    %607 = vmatpush.bf16.msra.mxu0 %v396
    %608 = vmatpush.bf16.msra.mxu0 %v392
    %609 = vmatmul.bf16.gmra.mxu0 %v121
    %v610 = vpop.f32.mrf.mxu0
    %v611 = vadd.f32 %v192, %v610
    %v612 = vpop.f32.mrf.mxu0
    %v613 = vadd.f32 %v192, %v612
    %614 = vdwg.mxu0
    %615 = vmatpush.bf16.msra.mxu0 %v452
    %616 = vmatpush.bf16.msra.mxu0 %v448
    %617 = vmatpush.bf16.msra.mxu0 %v444
    %618 = vmatpush.bf16.msra.mxu0 %v440
    %619 = vmatpush.bf16.msra.mxu0 %v436
    %620 = vmatpush.bf16.msra.mxu0 %v432
    %621 = vmatpush.bf16.msra.mxu0 %v428
    %622 = vmatpush.bf16.msra.mxu0 %v424
    %623 = vmatmul.bf16.gmra.mxu0 %v122
    %v624 = vpop.f32.mrf.mxu0
    %v625 = vadd.f32 %v611, %v624
    %v626 = vpop.f32.mrf.mxu0
    %v627 = vadd.f32 %v613, %v626
    %628 = vdwg.mxu0
    %v629 = vmax.f32 %v541, 0.0
    %v630 = vmax.f32 %v569, 0.0
    %v631 = vmax.f32 %v597, 0.0
    %v632 = vmax.f32 %v625, 0.0
    %v633 = vmax.f32 %v543, 0.0
    %v634 = vmax.f32 %v571, 0.0
    %v635 = vmax.f32 %v599, 0.0
    %v636 = vmax.f32 %v627, 0.0
    %v637 = vpack.c.bf16 %v633, %v629
    %v638 = vpack.c.bf16 %v634, %v630
    %v639 = vpack.c.bf16 %v635, %v631
    %v640 = vpack.c.bf16 %v636, %v632
    %v641 = vld [vmem:[#allocation8] sm:$0xff]
    %v642 = vld [vmem:[#allocation8 + $0x8] sm:$0xff]
    %v643 = vld [vmem:[#allocation8 + $0x10] sm:$0xff]
    %v644 = vld [vmem:[#allocation8 + $0x18] sm:$0xff]
    %v645 = vld [vmem:[#allocation8 + $0x20] sm:$0xff]
    %v646 = vld [vmem:[#allocation8 + $0x28] sm:$0xff]
    %v647 = vld [vmem:[#allocation8 + $0x30] sm:$0xff]
    %v648 = vld [vmem:[#allocation8 + $0x38] sm:$0xff]
    %v649 = vld [vmem:[#allocation8 + $0x40] sm:$0xff]
    %v650 = vld [vmem:[#allocation8 + $0x48] sm:$0xff]
    %v651 = vld [vmem:[#allocation8 + $0x50] sm:$0xff]
    %v652 = vld [vmem:[#allocation8 + $0x58] sm:$0xff]
    %v653 = vld [vmem:[#allocation8 + $0x60] sm:$0xff]
    %v654 = vld [vmem:[#allocation8 + $0x68] sm:$0xff]
    %v655 = vld [vmem:[#allocation8 + $0x70] sm:$0xff]
    %v656 = vld [vmem:[#allocation8 + $0x78] sm:$0xff]
    %v657 = vld [vmem:[#allocation8 + $0x80] sm:$0xff]
    %v658 = vld [vmem:[#allocation8 + $0x88] sm:$0xff]
    %v659 = vld [vmem:[#allocation8 + $0x90] sm:$0xff]
    %v660 = vld [vmem:[#allocation8 + $0x98] sm:$0xff]
    %v661 = vld [vmem:[#allocation8 + $0xa0] sm:$0xff]
    %v662 = vld [vmem:[#allocation8 + $0xa8] sm:$0xff]
    %v663 = vld [vmem:[#allocation8 + $0xb0] sm:$0xff]
    %v664 = vld [vmem:[#allocation8 + $0xb8] sm:$0xff]
    %v665 = vld [vmem:[#allocation8 + $0xc0] sm:$0xff]
    %v666 = vld [vmem:[#allocation8 + $0xc8] sm:$0xff]
    %v667 = vld [vmem:[#allocation8 + $0xd0] sm:$0xff]
    %v668 = vld [vmem:[#allocation8 + $0xd8] sm:$0xff]
    %v669 = vld [vmem:[#allocation8 + $0xe0] sm:$0xff]
    %v670 = vld [vmem:[#allocation8 + $0xe8] sm:$0xff]
    %v671 = vld [vmem:[#allocation8 + $0xf0] sm:$0xff]
    %v672 = vld [vmem:[#allocation8 + $0xf8] sm:$0xff]
    %v673 = vld [vmem:[#allocation8 + $0x100] sm:$0xff]
    %v674 = vld [vmem:[#allocation8 + $0x108] sm:$0xff]
    %v675 = vld [vmem:[#allocation8 + $0x110] sm:$0xff]
    %v676 = vld [vmem:[#allocation8 + $0x118] sm:$0xff]
    %v677 = vld [vmem:[#allocation8 + $0x120] sm:$0xff]
    %v678 = vld [vmem:[#allocation8 + $0x128] sm:$0xff]
    %v679 = vld [vmem:[#allocation8 + $0x130] sm:$0xff]
    %v680 = vld [vmem:[#allocation8 + $0x138] sm:$0xff]
    %v681 = vld [vmem:[#allocation8 + $0x140] sm:$0xff]
    %v682 = vld [vmem:[#allocation8 + $0x148] sm:$0xff]
    %v683 = vld [vmem:[#allocation8 + $0x150] sm:$0xff]
    %v684 = vld [vmem:[#allocation8 + $0x158] sm:$0xff]
    %v685 = vld [vmem:[#allocation8 + $0x160] sm:$0xff]
    %v686 = vld [vmem:[#allocation8 + $0x168] sm:$0xff]
    %v687 = vld [vmem:[#allocation8 + $0x170] sm:$0xff]
    %v688 = vld [vmem:[#allocation8 + $0x178] sm:$0xff]
    %v689 = vld [vmem:[#allocation8 + $0x180] sm:$0xff]
    %v690 = vld [vmem:[#allocation8 + $0x188] sm:$0xff]
    %v691 = vld [vmem:[#allocation8 + $0x190] sm:$0xff]
    %v692 = vld [vmem:[#allocation8 + $0x198] sm:$0xff]
    %v693 = vld [vmem:[#allocation8 + $0x1a0] sm:$0xff]
    %v694 = vld [vmem:[#allocation8 + $0x1a8] sm:$0xff]
    %v695 = vld [vmem:[#allocation8 + $0x1b0] sm:$0xff]
    %v696 = vld [vmem:[#allocation8 + $0x1b8] sm:$0xff]
    %v697 = vld [vmem:[#allocation8 + $0x1c0] sm:$0xff]
    %v698 = vld [vmem:[#allocation8 + $0x1c8] sm:$0xff]
    %v699 = vld [vmem:[#allocation8 + $0x1d0] sm:$0xff]
    %v700 = vld [vmem:[#allocation8 + $0x1d8] sm:$0xff]
    %v701 = vld [vmem:[#allocation8 + $0x1e0] sm:$0xff]
    %v702 = vld [vmem:[#allocation8 + $0x1e8] sm:$0xff]
    %v703 = vld [vmem:[#allocation8 + $0x1f0] sm:$0xff]
    %v704 = vld [vmem:[#allocation8 + $0x1f8] sm:$0xff]
    %v705 = vld [vmem:[#allocation8 + $0x200] sm:$0xff]
    %v706 = vld [vmem:[#allocation8 + $0x208] sm:$0xff]
    %v707 = vld [vmem:[#allocation8 + $0x210] sm:$0xff]
    %v708 = vld [vmem:[#allocation8 + $0x218] sm:$0xff]
    %v709 = vld [vmem:[#allocation8 + $0x220] sm:$0xff]
    %v710 = vld [vmem:[#allocation8 + $0x228] sm:$0xff]
    %v711 = vld [vmem:[#allocation8 + $0x230] sm:$0xff]
    %v712 = vld [vmem:[#allocation8 + $0x238] sm:$0xff]
    %v713 = vld [vmem:[#allocation8 + $0x240] sm:$0xff]
    %v714 = vld [vmem:[#allocation8 + $0x248] sm:$0xff]
    %v715 = vld [vmem:[#allocation8 + $0x250] sm:$0xff]
    %v716 = vld [vmem:[#allocation8 + $0x258] sm:$0xff]
    %v717 = vld [vmem:[#allocation8 + $0x260] sm:$0xff]
    %v718 = vld [vmem:[#allocation8 + $0x268] sm:$0xff]
    %v719 = vld [vmem:[#allocation8 + $0x270] sm:$0xff]
    %v720 = vld [vmem:[#allocation8 + $0x278] sm:$0xff]
    %v721 = vld [vmem:[#allocation8 + $0x280] sm:$0xff]
    %v722 = vld [vmem:[#allocation8 + $0x288] sm:$0xff]
    %v723 = vld [vmem:[#allocation8 + $0x290] sm:$0xff]
    %v724 = vld [vmem:[#allocation8 + $0x298] sm:$0xff]
    %v725 = vld [vmem:[#allocation8 + $0x2a0] sm:$0xff]
    %v726 = vld [vmem:[#allocation8 + $0x2a8] sm:$0xff]
    %v727 = vld [vmem:[#allocation8 + $0x2b0] sm:$0xff]
    %v728 = vld [vmem:[#allocation8 + $0x2b8] sm:$0xff]
    %v729 = vld [vmem:[#allocation8 + $0x2c0] sm:$0xff]
    %v730 = vld [vmem:[#allocation8 + $0x2c8] sm:$0xff]
    %v731 = vld [vmem:[#allocation8 + $0x2d0] sm:$0xff]
    %v732 = vld [vmem:[#allocation8 + $0x2d8] sm:$0xff]
    %v733 = vld [vmem:[#allocation8 + $0x2e0] sm:$0xff]
    %v734 = vld [vmem:[#allocation8 + $0x2e8] sm:$0xff]
    %v735 = vld [vmem:[#allocation8 + $0x2f0] sm:$0xff]
    %v736 = vld [vmem:[#allocation8 + $0x2f8] sm:$0xff]
    %v737 = vld [vmem:[#allocation8 + $0x300] sm:$0xff]
    %v738 = vld [vmem:[#allocation8 + $0x308] sm:$0xff]
    %v739 = vld [vmem:[#allocation8 + $0x310] sm:$0xff]
    %v740 = vld [vmem:[#allocation8 + $0x318] sm:$0xff]
    %v741 = vld [vmem:[#allocation8 + $0x320] sm:$0xff]
    %v742 = vld [vmem:[#allocation8 + $0x328] sm:$0xff]
    %v743 = vld [vmem:[#allocation8 + $0x330] sm:$0xff]
    %v744 = vld [vmem:[#allocation8 + $0x338] sm:$0xff]
    %v745 = vld [vmem:[#allocation8 + $0x340] sm:$0xff]
    %v746 = vld [vmem:[#allocation8 + $0x348] sm:$0xff]
    %v747 = vld [vmem:[#allocation8 + $0x350] sm:$0xff]
    %v748 = vld [vmem:[#allocation8 + $0x358] sm:$0xff]
    %v749 = vld [vmem:[#allocation8 + $0x360] sm:$0xff]
    %v750 = vld [vmem:[#allocation8 + $0x368] sm:$0xff]
    %v751 = vld [vmem:[#allocation8 + $0x370] sm:$0xff]
    %v752 = vld [vmem:[#allocation8 + $0x378] sm:$0xff]
    %v753 = vld [vmem:[#allocation8 + $0x380] sm:$0xff]
    %v754 = vld [vmem:[#allocation8 + $0x388] sm:$0xff]
    %v755 = vld [vmem:[#allocation8 + $0x390] sm:$0xff]
    %v756 = vld [vmem:[#allocation8 + $0x398] sm:$0xff]
    %v757 = vld [vmem:[#allocation8 + $0x3a0] sm:$0xff]
    %v758 = vld [vmem:[#allocation8 + $0x3a8] sm:$0xff]
    %v759 = vld [vmem:[#allocation8 + $0x3b0] sm:$0xff]
    %v760 = vld [vmem:[#allocation8 + $0x3b8] sm:$0xff]
    %v761 = vld [vmem:[#allocation8 + $0x3c0] sm:$0xff]
    %v762 = vld [vmem:[#allocation8 + $0x3c8] sm:$0xff]
    %v763 = vld [vmem:[#allocation8 + $0x3d0] sm:$0xff]
    %v764 = vld [vmem:[#allocation8 + $0x3d8] sm:$0xff]
    %v765 = vld [vmem:[#allocation8 + $0x3e0] sm:$0xff]
    %v766 = vld [vmem:[#allocation8 + $0x3e8] sm:$0xff]
    %v767 = vld [vmem:[#allocation8 + $0x3f0] sm:$0xff]
    %v768 = vld [vmem:[#allocation8 + $0x3f8] sm:$0xff]
    %v769 = vld [vmem:[#allocation10] sm:$0xf]
    %v771 = vperm.slane %v769, 0
    %v772 = vperm.slane %v769, 1
    %v773 = vperm.slane %v769, 2
    %v774 = vperm.slane %v769, 3
    %v907 = vunpack.c.l.b16 %v641
    %v908 = vunpack.c.h.b16 %v641
    %v909 = vunpack.c.l.b16 %v642
    %v910 = vunpack.c.h.b16 %v642
    %v911 = vunpack.c.l.b16 %v643
    %v912 = vunpack.c.h.b16 %v643
    %v913 = vunpack.c.l.b16 %v644
    %v914 = vunpack.c.h.b16 %v644
    %v915 = vunpack.c.l.b16 %v645
    %v916 = vunpack.c.h.b16 %v645
    %v917 = vunpack.c.l.b16 %v646
    %v918 = vunpack.c.h.b16 %v646
    %v919 = vunpack.c.l.b16 %v647
    %v920 = vunpack.c.h.b16 %v647
    %v921 = vunpack.c.l.b16 %v648
    %v922 = vunpack.c.h.b16 %v648
    %v923 = vunpack.c.l.b16 %v649
    %v924 = vunpack.c.h.b16 %v649
    %v925 = vunpack.c.l.b16 %v650
    %v926 = vunpack.c.h.b16 %v650
    %v927 = vunpack.c.l.b16 %v651
    %v928 = vunpack.c.h.b16 %v651
    %v929 = vunpack.c.l.b16 %v652
    %v930 = vunpack.c.h.b16 %v652
    %v931 = vunpack.c.l.b16 %v653
    %v932 = vunpack.c.h.b16 %v653
    %v933 = vunpack.c.l.b16 %v654
    %v934 = vunpack.c.h.b16 %v654
    %v935 = vunpack.c.l.b16 %v655
    %v936 = vunpack.c.h.b16 %v655
    %v937 = vunpack.c.l.b16 %v656
    %v938 = vunpack.c.h.b16 %v656
    %v939 = vunpack.c.l.b16 %v657
    %v940 = vunpack.c.h.b16 %v657
    %v941 = vunpack.c.l.b16 %v658
    %v942 = vunpack.c.h.b16 %v658
    %v943 = vunpack.c.l.b16 %v659
    %v944 = vunpack.c.h.b16 %v659
    %v945 = vunpack.c.l.b16 %v660
    %v946 = vunpack.c.h.b16 %v660
    %v947 = vunpack.c.l.b16 %v661
    %v948 = vunpack.c.h.b16 %v661
    %v949 = vunpack.c.l.b16 %v662
    %v950 = vunpack.c.h.b16 %v662
    %v951 = vunpack.c.l.b16 %v663
    %v952 = vunpack.c.h.b16 %v663
    %v953 = vunpack.c.l.b16 %v664
    %v954 = vunpack.c.h.b16 %v664
    %v955 = vunpack.c.l.b16 %v665
    %v956 = vunpack.c.h.b16 %v665
    %v957 = vunpack.c.l.b16 %v666
    %v958 = vunpack.c.h.b16 %v666
    %v959 = vunpack.c.l.b16 %v667
    %v960 = vunpack.c.h.b16 %v667
    %v961 = vunpack.c.l.b16 %v668
    %v962 = vunpack.c.h.b16 %v668
    %v963 = vunpack.c.l.b16 %v669
    %v964 = vunpack.c.h.b16 %v669
    %v965 = vunpack.c.l.b16 %v670
    %v966 = vunpack.c.h.b16 %v670
    %v967 = vunpack.c.l.b16 %v671
    %v968 = vunpack.c.h.b16 %v671
    %v969 = vunpack.c.l.b16 %v672
    %v970 = vunpack.c.h.b16 %v672
    %v971 = vunpack.c.l.b16 %v673
    %v972 = vunpack.c.h.b16 %v673
    %v973 = vunpack.c.l.b16 %v674
    %v974 = vunpack.c.h.b16 %v674
    %v975 = vunpack.c.l.b16 %v675
    %v976 = vunpack.c.h.b16 %v675
    %v977 = vunpack.c.l.b16 %v676
    %v978 = vunpack.c.h.b16 %v676
    %v979 = vunpack.c.l.b16 %v677
    %v980 = vunpack.c.h.b16 %v677
    %v981 = vunpack.c.l.b16 %v678
    %v982 = vunpack.c.h.b16 %v678
    %v983 = vunpack.c.l.b16 %v679
    %v984 = vunpack.c.h.b16 %v679
    %v985 = vunpack.c.l.b16 %v680
    %v986 = vunpack.c.h.b16 %v680
    %v987 = vunpack.c.l.b16 %v681
    %v988 = vunpack.c.h.b16 %v681
    %v989 = vunpack.c.l.b16 %v682
    %v990 = vunpack.c.h.b16 %v682
    %v991 = vunpack.c.l.b16 %v683
    %v992 = vunpack.c.h.b16 %v683
    %v993 = vunpack.c.l.b16 %v684
    %v994 = vunpack.c.h.b16 %v684
    %v995 = vunpack.c.l.b16 %v685
    %v996 = vunpack.c.h.b16 %v685
    %v997 = vunpack.c.l.b16 %v686
    %v998 = vunpack.c.h.b16 %v686
    %v999 = vunpack.c.l.b16 %v687
    %v1000 = vunpack.c.h.b16 %v687
    %v1001 = vunpack.c.l.b16 %v688
    %v1002 = vunpack.c.h.b16 %v688
    %v1003 = vunpack.c.l.b16 %v689
    %v1004 = vunpack.c.h.b16 %v689
    %v1005 = vunpack.c.l.b16 %v690
    %v1006 = vunpack.c.h.b16 %v690
    %v1007 = vunpack.c.l.b16 %v691
    %v1008 = vunpack.c.h.b16 %v691
    %v1009 = vunpack.c.l.b16 %v692
    %v1010 = vunpack.c.h.b16 %v692
    %v1011 = vunpack.c.l.b16 %v693
    %v1012 = vunpack.c.h.b16 %v693
    %v1013 = vunpack.c.l.b16 %v694
    %v1014 = vunpack.c.h.b16 %v694
    %v1015 = vunpack.c.l.b16 %v695
    %v1016 = vunpack.c.h.b16 %v695
    %v1017 = vunpack.c.l.b16 %v696
    %v1018 = vunpack.c.h.b16 %v696
    %v1019 = vunpack.c.l.b16 %v697
    %v1020 = vunpack.c.h.b16 %v697
    %v1021 = vunpack.c.l.b16 %v698
    %v1022 = vunpack.c.h.b16 %v698
    %v1023 = vunpack.c.l.b16 %v699
    %v1024 = vunpack.c.h.b16 %v699
    %v1025 = vunpack.c.l.b16 %v700
    %v1026 = vunpack.c.h.b16 %v700
    %v1027 = vunpack.c.l.b16 %v701
    %v1028 = vunpack.c.h.b16 %v701
    %v1029 = vunpack.c.l.b16 %v702
    %v1030 = vunpack.c.h.b16 %v702
    %v1031 = vunpack.c.l.b16 %v703
    %v1032 = vunpack.c.h.b16 %v703
    %v1033 = vunpack.c.l.b16 %v704
    %v1034 = vunpack.c.h.b16 %v704
    %v1035 = vunpack.c.l.b16 %v705
    %v1036 = vunpack.c.h.b16 %v705
    %v1037 = vunpack.c.l.b16 %v706
    %v1038 = vunpack.c.h.b16 %v706
    %v1039 = vunpack.c.l.b16 %v707
    %v1040 = vunpack.c.h.b16 %v707
    %v1041 = vunpack.c.l.b16 %v708
    %v1042 = vunpack.c.h.b16 %v708
    %v1043 = vunpack.c.l.b16 %v709
    %v1044 = vunpack.c.h.b16 %v709
    %v1045 = vunpack.c.l.b16 %v710
    %v1046 = vunpack.c.h.b16 %v710
    %v1047 = vunpack.c.l.b16 %v711
    %v1048 = vunpack.c.h.b16 %v711
    %v1049 = vunpack.c.l.b16 %v712
    %v1050 = vunpack.c.h.b16 %v712
    %v1051 = vunpack.c.l.b16 %v713
    %v1052 = vunpack.c.h.b16 %v713
    %v1053 = vunpack.c.l.b16 %v714
    %v1054 = vunpack.c.h.b16 %v714
    %v1055 = vunpack.c.l.b16 %v715
    %v1056 = vunpack.c.h.b16 %v715
    %v1057 = vunpack.c.l.b16 %v716
    %v1058 = vunpack.c.h.b16 %v716
    %v1059 = vunpack.c.l.b16 %v717
    %v1060 = vunpack.c.h.b16 %v717
    %v1061 = vunpack.c.l.b16 %v718
    %v1062 = vunpack.c.h.b16 %v718
    %v1063 = vunpack.c.l.b16 %v719
    %v1064 = vunpack.c.h.b16 %v719
    %v1065 = vunpack.c.l.b16 %v720
    %v1066 = vunpack.c.h.b16 %v720
    %v1067 = vunpack.c.l.b16 %v721
    %v1068 = vunpack.c.h.b16 %v721
    %v1069 = vunpack.c.l.b16 %v722
    %v1070 = vunpack.c.h.b16 %v722
    %v1071 = vunpack.c.l.b16 %v723
    %v1072 = vunpack.c.h.b16 %v723
    %v1073 = vunpack.c.l.b16 %v724
    %v1074 = vunpack.c.h.b16 %v724
    %v1075 = vunpack.c.l.b16 %v725
    %v1076 = vunpack.c.h.b16 %v725
    %v1077 = vunpack.c.l.b16 %v726
    %v1078 = vunpack.c.h.b16 %v726
    %v1079 = vunpack.c.l.b16 %v727
    %v1080 = vunpack.c.h.b16 %v727
    %v1081 = vunpack.c.l.b16 %v728
    %v1082 = vunpack.c.h.b16 %v728
    %v1083 = vunpack.c.l.b16 %v729
    %v1084 = vunpack.c.h.b16 %v729
    %v1085 = vunpack.c.l.b16 %v730
    %v1086 = vunpack.c.h.b16 %v730
    %v1087 = vunpack.c.l.b16 %v731
    %v1088 = vunpack.c.h.b16 %v731
    %v1089 = vunpack.c.l.b16 %v732
    %v1090 = vunpack.c.h.b16 %v732
    %v1091 = vunpack.c.l.b16 %v733
    %v1092 = vunpack.c.h.b16 %v733
    %v1093 = vunpack.c.l.b16 %v734
    %v1094 = vunpack.c.h.b16 %v734
    %v1095 = vunpack.c.l.b16 %v735
    %v1096 = vunpack.c.h.b16 %v735
    %v1097 = vunpack.c.l.b16 %v736
    %v1098 = vunpack.c.h.b16 %v736
    %v1099 = vunpack.c.l.b16 %v737
    %v1100 = vunpack.c.h.b16 %v737
    %v1101 = vunpack.c.l.b16 %v738
    %v1102 = vunpack.c.h.b16 %v738
    %v1103 = vunpack.c.l.b16 %v739
    %v1104 = vunpack.c.h.b16 %v739
    %v1105 = vunpack.c.l.b16 %v740
    %v1106 = vunpack.c.h.b16 %v740
    %v1107 = vunpack.c.l.b16 %v741
    %v1108 = vunpack.c.h.b16 %v741
    %v1109 = vunpack.c.l.b16 %v742
    %v1110 = vunpack.c.h.b16 %v742
    %v1111 = vunpack.c.l.b16 %v743
    %v1112 = vunpack.c.h.b16 %v743
    %v1113 = vunpack.c.l.b16 %v744
    %v1114 = vunpack.c.h.b16 %v744
    %v1115 = vunpack.c.l.b16 %v745
    %v1116 = vunpack.c.h.b16 %v745
    %v1117 = vunpack.c.l.b16 %v746
    %v1118 = vunpack.c.h.b16 %v746
    %v1119 = vunpack.c.l.b16 %v747
    %v1120 = vunpack.c.h.b16 %v747
    %v1121 = vunpack.c.l.b16 %v748
    %v1122 = vunpack.c.h.b16 %v748
    %v1123 = vunpack.c.l.b16 %v749
    %v1124 = vunpack.c.h.b16 %v749
    %v1125 = vunpack.c.l.b16 %v750
    %v1126 = vunpack.c.h.b16 %v750
    %v1127 = vunpack.c.l.b16 %v751
    %v1128 = vunpack.c.h.b16 %v751
    %v1129 = vunpack.c.l.b16 %v752
    %v1130 = vunpack.c.h.b16 %v752
    %v1131 = vunpack.c.l.b16 %v753
    %v1132 = vunpack.c.h.b16 %v753
    %v1133 = vunpack.c.l.b16 %v754
    %v1134 = vunpack.c.h.b16 %v754
    %v1135 = vunpack.c.l.b16 %v755
    %v1136 = vunpack.c.h.b16 %v755
    %v1137 = vunpack.c.l.b16 %v756
    %v1138 = vunpack.c.h.b16 %v756
    %v1139 = vunpack.c.l.b16 %v757
    %v1140 = vunpack.c.h.b16 %v757
    %v1141 = vunpack.c.l.b16 %v758
    %v1142 = vunpack.c.h.b16 %v758
    %v1143 = vunpack.c.l.b16 %v759
    %v1144 = vunpack.c.h.b16 %v759
    %v1145 = vunpack.c.l.b16 %v760
    %v1146 = vunpack.c.h.b16 %v760
    %v1147 = vunpack.c.l.b16 %v761
    %v1148 = vunpack.c.h.b16 %v761
    %v1149 = vunpack.c.l.b16 %v762
    %v1150 = vunpack.c.h.b16 %v762
    %v1151 = vunpack.c.l.b16 %v763
    %v1152 = vunpack.c.h.b16 %v763
    %v1153 = vunpack.c.l.b16 %v764
    %v1154 = vunpack.c.h.b16 %v764
    %v1155 = vunpack.c.l.b16 %v765
    %v1156 = vunpack.c.h.b16 %v765
    %v1157 = vunpack.c.l.b16 %v766
    %v1158 = vunpack.c.h.b16 %v766
    %v1159 = vunpack.c.l.b16 %v767
    %v1160 = vunpack.c.h.b16 %v767
    %v1161 = vunpack.c.l.b16 %v768
    %v1162 = vunpack.c.h.b16 %v768
    %v1163 = vpack.c.b16 %v911, %v907
    %v1164 = vpack.c.b16 %v912, %v908
    %v1165 = vpack.c.b16 %v913, %v909
    %v1166 = vpack.c.b16 %v914, %v910
    %v1167 = vpack.c.b16 %v919, %v915
    %v1168 = vpack.c.b16 %v920, %v916
    %v1169 = vpack.c.b16 %v921, %v917
    %v1170 = vpack.c.b16 %v922, %v918
    %v1171 = vpack.c.b16 %v927, %v923
    %v1172 = vpack.c.b16 %v928, %v924
    %v1173 = vpack.c.b16 %v929, %v925
    %v1174 = vpack.c.b16 %v930, %v926
    %v1175 = vpack.c.b16 %v935, %v931
    %v1176 = vpack.c.b16 %v936, %v932
    %v1177 = vpack.c.b16 %v937, %v933
    %v1178 = vpack.c.b16 %v938, %v934
    %v1179 = vpack.c.b16 %v943, %v939
    %v1180 = vpack.c.b16 %v944, %v940
    %v1181 = vpack.c.b16 %v945, %v941
    %v1182 = vpack.c.b16 %v946, %v942
    %v1183 = vpack.c.b16 %v951, %v947
    %v1184 = vpack.c.b16 %v952, %v948
    %v1185 = vpack.c.b16 %v953, %v949
    %v1186 = vpack.c.b16 %v954, %v950
    %v1187 = vpack.c.b16 %v959, %v955
    %v1188 = vpack.c.b16 %v960, %v956
    %v1189 = vpack.c.b16 %v961, %v957
    %v1190 = vpack.c.b16 %v962, %v958
    %v1191 = vpack.c.b16 %v967, %v963
    %v1192 = vpack.c.b16 %v968, %v964
    %v1193 = vpack.c.b16 %v969, %v965
    %v1194 = vpack.c.b16 %v970, %v966
    %v1195 = vpack.c.b16 %v975, %v971
    %v1196 = vpack.c.b16 %v976, %v972
    %v1197 = vpack.c.b16 %v977, %v973
    %v1198 = vpack.c.b16 %v978, %v974
    %v1199 = vpack.c.b16 %v983, %v979
    %v1200 = vpack.c.b16 %v984, %v980
    %v1201 = vpack.c.b16 %v985, %v981
    %v1202 = vpack.c.b16 %v986, %v982
    %v1203 = vpack.c.b16 %v991, %v987
    %v1204 = vpack.c.b16 %v992, %v988
    %v1205 = vpack.c.b16 %v993, %v989
    %v1206 = vpack.c.b16 %v994, %v990
    %v1207 = vpack.c.b16 %v999, %v995
    %v1208 = vpack.c.b16 %v1000, %v996
    %v1209 = vpack.c.b16 %v1001, %v997
    %v1210 = vpack.c.b16 %v1002, %v998
    %v1211 = vpack.c.b16 %v1007, %v1003
    %v1212 = vpack.c.b16 %v1008, %v1004
    %v1213 = vpack.c.b16 %v1009, %v1005
    %v1214 = vpack.c.b16 %v1010, %v1006
    %v1215 = vpack.c.b16 %v1015, %v1011
    %v1216 = vpack.c.b16 %v1016, %v1012
    %v1217 = vpack.c.b16 %v1017, %v1013
    %v1218 = vpack.c.b16 %v1018, %v1014
    %v1219 = vpack.c.b16 %v1023, %v1019
    %v1220 = vpack.c.b16 %v1024, %v1020
    %v1221 = vpack.c.b16 %v1025, %v1021
    %v1222 = vpack.c.b16 %v1026, %v1022
    %v1223 = vpack.c.b16 %v1031, %v1027
    %v1224 = vpack.c.b16 %v1032, %v1028
    %v1225 = vpack.c.b16 %v1033, %v1029
    %v1226 = vpack.c.b16 %v1034, %v1030
    %v1227 = vpack.c.b16 %v1039, %v1035
    %v1228 = vpack.c.b16 %v1040, %v1036
    %v1229 = vpack.c.b16 %v1041, %v1037
    %v1230 = vpack.c.b16 %v1042, %v1038
    %v1231 = vpack.c.b16 %v1047, %v1043
    %v1232 = vpack.c.b16 %v1048, %v1044
    %v1233 = vpack.c.b16 %v1049, %v1045
    %v1234 = vpack.c.b16 %v1050, %v1046
    %v1235 = vpack.c.b16 %v1055, %v1051
    %v1236 = vpack.c.b16 %v1056, %v1052
    %v1237 = vpack.c.b16 %v1057, %v1053
    %v1238 = vpack.c.b16 %v1058, %v1054
    %v1239 = vpack.c.b16 %v1063, %v1059
    %v1240 = vpack.c.b16 %v1064, %v1060
    %v1241 = vpack.c.b16 %v1065, %v1061
    %v1242 = vpack.c.b16 %v1066, %v1062
    %v1243 = vpack.c.b16 %v1071, %v1067
    %v1244 = vpack.c.b16 %v1072, %v1068
    %v1245 = vpack.c.b16 %v1073, %v1069
    %v1246 = vpack.c.b16 %v1074, %v1070
    %v1247 = vpack.c.b16 %v1079, %v1075
    %v1248 = vpack.c.b16 %v1080, %v1076
    %v1249 = vpack.c.b16 %v1081, %v1077
    %v1250 = vpack.c.b16 %v1082, %v1078
    %v1251 = vpack.c.b16 %v1087, %v1083
    %v1252 = vpack.c.b16 %v1088, %v1084
    %v1253 = vpack.c.b16 %v1089, %v1085
    %v1254 = vpack.c.b16 %v1090, %v1086
    %v1255 = vpack.c.b16 %v1095, %v1091
    %v1256 = vpack.c.b16 %v1096, %v1092
    %v1257 = vpack.c.b16 %v1097, %v1093
    %v1258 = vpack.c.b16 %v1098, %v1094
    %v1259 = vpack.c.b16 %v1103, %v1099
    %v1260 = vpack.c.b16 %v1104, %v1100
    %v1261 = vpack.c.b16 %v1105, %v1101
    %v1262 = vpack.c.b16 %v1106, %v1102
    %v1263 = vpack.c.b16 %v1111, %v1107
    %v1264 = vpack.c.b16 %v1112, %v1108
    %v1265 = vpack.c.b16 %v1113, %v1109
    %v1266 = vpack.c.b16 %v1114, %v1110
    %v1267 = vpack.c.b16 %v1119, %v1115
    %v1268 = vpack.c.b16 %v1120, %v1116
    %v1269 = vpack.c.b16 %v1121, %v1117
    %v1270 = vpack.c.b16 %v1122, %v1118
    %v1271 = vpack.c.b16 %v1127, %v1123
    %v1272 = vpack.c.b16 %v1128, %v1124
    %v1273 = vpack.c.b16 %v1129, %v1125
    %v1274 = vpack.c.b16 %v1130, %v1126
    %v1275 = vpack.c.b16 %v1135, %v1131
    %v1276 = vpack.c.b16 %v1136, %v1132
    %v1277 = vpack.c.b16 %v1137, %v1133
    %v1278 = vpack.c.b16 %v1138, %v1134
    %v1279 = vpack.c.b16 %v1143, %v1139
    %v1280 = vpack.c.b16 %v1144, %v1140
    %v1281 = vpack.c.b16 %v1145, %v1141
    %v1282 = vpack.c.b16 %v1146, %v1142
    %v1283 = vpack.c.b16 %v1151, %v1147
    %v1284 = vpack.c.b16 %v1152, %v1148
    %v1285 = vpack.c.b16 %v1153, %v1149
    %v1286 = vpack.c.b16 %v1154, %v1150
    %v1287 = vpack.c.b16 %v1159, %v1155
    %v1288 = vpack.c.b16 %v1160, %v1156
    %v1289 = vpack.c.b16 %v1161, %v1157
    %v1290 = vpack.c.b16 %v1162, %v1158
    %1419 = vmatpush.bf16.msra.mxu0 %v1191
    %1420 = vmatpush.bf16.msra.mxu0 %v1187
    %1421 = vmatpush.bf16.msra.mxu0 %v1183
    %1422 = vmatpush.bf16.msra.mxu0 %v1179
    %1423 = vmatpush.bf16.msra.mxu0 %v1175
    %1424 = vmatpush.bf16.msra.mxu0 %v1171
    %1425 = vmatpush.bf16.msra.mxu0 %v1167
    %1426 = vmatpush.bf16.msra.mxu0 %v1163
    %1427 = vmatmul.bf16.gmra.mxu0 %v637
    %v1428 = vpop.f32.mrf.mxu0
    %v1429 = vadd.f32 %v771, %v1428
    %v1430 = vpop.f32.mrf.mxu0
    %v1431 = vadd.f32 %v771, %v1430
    %1432 = vdwg.mxu0
    %1433 = vmatpush.bf16.msra.mxu0 %v1223
    %1434 = vmatpush.bf16.msra.mxu0 %v1219
    %1435 = vmatpush.bf16.msra.mxu0 %v1215
    %1436 = vmatpush.bf16.msra.mxu0 %v1211
    %1437 = vmatpush.bf16.msra.mxu0 %v1207
    %1438 = vmatpush.bf16.msra.mxu0 %v1203
    %1439 = vmatpush.bf16.msra.mxu0 %v1199
    %1440 = vmatpush.bf16.msra.mxu0 %v1195
    %1441 = vmatmul.bf16.gmra.mxu0 %v638
    %v1442 = vpop.f32.mrf.mxu0
    %v1443 = vadd.f32 %v1429, %v1442
    %v1444 = vpop.f32.mrf.mxu0
    %v1445 = vadd.f32 %v1431, %v1444
    %1446 = vdwg.mxu0
    %1447 = vmatpush.bf16.msra.mxu0 %v1255
    %1448 = vmatpush.bf16.msra.mxu0 %v1251
    %1449 = vmatpush.bf16.msra.mxu0 %v1247
    %1450 = vmatpush.bf16.msra.mxu0 %v1243
    %1451 = vmatpush.bf16.msra.mxu0 %v1239
    %1452 = vmatpush.bf16.msra.mxu0 %v1235
    %1453 = vmatpush.bf16.msra.mxu0 %v1231
    %1454 = vmatpush.bf16.msra.mxu0 %v1227
    %1455 = vmatmul.bf16.gmra.mxu0 %v639
    %v1456 = vpop.f32.mrf.mxu0
    %v1457 = vadd.f32 %v1443, %v1456
    %v1458 = vpop.f32.mrf.mxu0
    %v1459 = vadd.f32 %v1445, %v1458
    %1460 = vdwg.mxu0
    %1461 = vmatpush.bf16.msra.mxu0 %v1287
    %1462 = vmatpush.bf16.msra.mxu0 %v1283
    %1463 = vmatpush.bf16.msra.mxu0 %v1279
    %1464 = vmatpush.bf16.msra.mxu0 %v1275
    %1465 = vmatpush.bf16.msra.mxu0 %v1271
    %1466 = vmatpush.bf16.msra.mxu0 %v1267
    %1467 = vmatpush.bf16.msra.mxu0 %v1263
    %1468 = vmatpush.bf16.msra.mxu0 %v1259
    %1469 = vmatmul.bf16.gmra.mxu0 %v640
    %v1470 = vpop.f32.mrf.mxu0
    %v1471 = vadd.f32 %v1457, %v1470
    %v1472 = vpop.f32.mrf.mxu0
    %v1473 = vadd.f32 %v1459, %v1472
    %1474 = vdwg.mxu0
    %1475 = vmatpush.bf16.msra.mxu0 %v1192
    %1476 = vmatpush.bf16.msra.mxu0 %v1188
    %1477 = vmatpush.bf16.msra.mxu0 %v1184
    %1478 = vmatpush.bf16.msra.mxu0 %v1180
    %1479 = vmatpush.bf16.msra.mxu0 %v1176
    %1480 = vmatpush.bf16.msra.mxu0 %v1172
    %1481 = vmatpush.bf16.msra.mxu0 %v1168
    %1482 = vmatpush.bf16.msra.mxu0 %v1164
    %1483 = vmatmul.bf16.gmra.mxu0 %v637
    %v1484 = vpop.f32.mrf.mxu0
    %v1485 = vadd.f32 %v772, %v1484
    %v1486 = vpop.f32.mrf.mxu0
    %v1487 = vadd.f32 %v772, %v1486
    %1488 = vdwg.mxu0
    %1489 = vmatpush.bf16.msra.mxu0 %v1224
    %1490 = vmatpush.bf16.msra.mxu0 %v1220
    %1491 = vmatpush.bf16.msra.mxu0 %v1216
    %1492 = vmatpush.bf16.msra.mxu0 %v1212
    %1493 = vmatpush.bf16.msra.mxu0 %v1208
    %1494 = vmatpush.bf16.msra.mxu0 %v1204
    %1495 = vmatpush.bf16.msra.mxu0 %v1200
    %1496 = vmatpush.bf16.msra.mxu0 %v1196
    %1497 = vmatmul.bf16.gmra.mxu0 %v638
    %v1498 = vpop.f32.mrf.mxu0
    %v1499 = vadd.f32 %v1485, %v1498
    %v1500 = vpop.f32.mrf.mxu0
    %v1501 = vadd.f32 %v1487, %v1500
    %1502 = vdwg.mxu0
    %1503 = vmatpush.bf16.msra.mxu0 %v1256
    %1504 = vmatpush.bf16.msra.mxu0 %v1252
    %1505 = vmatpush.bf16.msra.mxu0 %v1248
    %1506 = vmatpush.bf16.msra.mxu0 %v1244
    %1507 = vmatpush.bf16.msra.mxu0 %v1240
    %1508 = vmatpush.bf16.msra.mxu0 %v1236
    %1509 = vmatpush.bf16.msra.mxu0 %v1232
    %1510 = vmatpush.bf16.msra.mxu0 %v1228
    %1511 = vmatmul.bf16.gmra.mxu0 %v639
    %v1512 = vpop.f32.mrf.mxu0
    %v1513 = vadd.f32 %v1499, %v1512
    %v1514 = vpop.f32.mrf.mxu0
    %v1515 = vadd.f32 %v1501, %v1514
    %1516 = vdwg.mxu0
    %1517 = vmatpush.bf16.msra.mxu0 %v1288
    %1518 = vmatpush.bf16.msra.mxu0 %v1284
    %1519 = vmatpush.bf16.msra.mxu0 %v1280
    %1520 = vmatpush.bf16.msra.mxu0 %v1276
    %1521 = vmatpush.bf16.msra.mxu0 %v1272
    %1522 = vmatpush.bf16.msra.mxu0 %v1268
    %1523 = vmatpush.bf16.msra.mxu0 %v1264
    %1524 = vmatpush.bf16.msra.mxu0 %v1260
    %1525 = vmatmul.bf16.gmra.mxu0 %v640
    %v1526 = vpop.f32.mrf.mxu0
    %v1527 = vadd.f32 %v1513, %v1526
    %v1528 = vpop.f32.mrf.mxu0
    %v1529 = vadd.f32 %v1515, %v1528
    %1530 = vdwg.mxu0
    %1531 = vmatpush.bf16.msra.mxu0 %v1193
    %1532 = vmatpush.bf16.msra.mxu0 %v1189
    %1533 = vmatpush.bf16.msra.mxu0 %v1185
    %1534 = vmatpush.bf16.msra.mxu0 %v1181
    %1535 = vmatpush.bf16.msra.mxu0 %v1177
    %1536 = vmatpush.bf16.msra.mxu0 %v1173
    %1537 = vmatpush.bf16.msra.mxu0 %v1169
    %1538 = vmatpush.bf16.msra.mxu0 %v1165
    %1539 = vmatmul.bf16.gmra.mxu0 %v637
    %v1540 = vpop.f32.mrf.mxu0
    %v1541 = vadd.f32 %v773, %v1540
    %v1542 = vpop.f32.mrf.mxu0
    %v1543 = vadd.f32 %v773, %v1542
    %1544 = vdwg.mxu0
    %1545 = vmatpush.bf16.msra.mxu0 %v1225
    %1546 = vmatpush.bf16.msra.mxu0 %v1221
    %1547 = vmatpush.bf16.msra.mxu0 %v1217
    %1548 = vmatpush.bf16.msra.mxu0 %v1213
    %1549 = vmatpush.bf16.msra.mxu0 %v1209
    %1550 = vmatpush.bf16.msra.mxu0 %v1205
    %1551 = vmatpush.bf16.msra.mxu0 %v1201
    %1552 = vmatpush.bf16.msra.mxu0 %v1197
    %1553 = vmatmul.bf16.gmra.mxu0 %v638
    %v1554 = vpop.f32.mrf.mxu0
    %v1555 = vadd.f32 %v1541, %v1554
    %v1556 = vpop.f32.mrf.mxu0
    %v1557 = vadd.f32 %v1543, %v1556
    %1558 = vdwg.mxu0
    %1559 = vmatpush.bf16.msra.mxu0 %v1257
    %1560 = vmatpush.bf16.msra.mxu0 %v1253
    %1561 = vmatpush.bf16.msra.mxu0 %v1249
    %1562 = vmatpush.bf16.msra.mxu0 %v1245
    %1563 = vmatpush.bf16.msra.mxu0 %v1241
    %1564 = vmatpush.bf16.msra.mxu0 %v1237
    %1565 = vmatpush.bf16.msra.mxu0 %v1233
    %1566 = vmatpush.bf16.msra.mxu0 %v1229
    %1567 = vmatmul.bf16.gmra.mxu0 %v639
    %v1568 = vpop.f32.mrf.mxu0
    %v1569 = vadd.f32 %v1555, %v1568
    %v1570 = vpop.f32.mrf.mxu0
    %v1571 = vadd.f32 %v1557, %v1570
    %1572 = vdwg.mxu0
    %1573 = vmatpush.bf16.msra.mxu0 %v1289
    %1574 = vmatpush.bf16.msra.mxu0 %v1285
    %1575 = vmatpush.bf16.msra.mxu0 %v1281
    %1576 = vmatpush.bf16.msra.mxu0 %v1277
    %1577 = vmatpush.bf16.msra.mxu0 %v1273
    %1578 = vmatpush.bf16.msra.mxu0 %v1269
    %1579 = vmatpush.bf16.msra.mxu0 %v1265
    %1580 = vmatpush.bf16.msra.mxu0 %v1261
    %1581 = vmatmul.bf16.gmra.mxu0 %v640
    %v1582 = vpop.f32.mrf.mxu0
    %v1583 = vadd.f32 %v1569, %v1582
    %v1584 = vpop.f32.mrf.mxu0
    %v1585 = vadd.f32 %v1571, %v1584
    %1586 = vdwg.mxu0
    %1587 = vmatpush.bf16.msra.mxu0 %v1194
    %1588 = vmatpush.bf16.msra.mxu0 %v1190
    %1589 = vmatpush.bf16.msra.mxu0 %v1186
    %1590 = vmatpush.bf16.msra.mxu0 %v1182
    %1591 = vmatpush.bf16.msra.mxu0 %v1178
    %1592 = vmatpush.bf16.msra.mxu0 %v1174
    %1593 = vmatpush.bf16.msra.mxu0 %v1170
    %1594 = vmatpush.bf16.msra.mxu0 %v1166
    %1595 = vmatmul.bf16.gmra.mxu0 %v637
    %v1596 = vpop.f32.mrf.mxu0
    %v1597 = vadd.f32 %v774, %v1596
    %v1598 = vpop.f32.mrf.mxu0
    %v1599 = vadd.f32 %v774, %v1598
    %1600 = vdwg.mxu0
    %1601 = vmatpush.bf16.msra.mxu0 %v1226
    %1602 = vmatpush.bf16.msra.mxu0 %v1222
    %1603 = vmatpush.bf16.msra.mxu0 %v1218
    %1604 = vmatpush.bf16.msra.mxu0 %v1214
    %1605 = vmatpush.bf16.msra.mxu0 %v1210
    %1606 = vmatpush.bf16.msra.mxu0 %v1206
    %1607 = vmatpush.bf16.msra.mxu0 %v1202
    %1608 = vmatpush.bf16.msra.mxu0 %v1198
    %1609 = vmatmul.bf16.gmra.mxu0 %v638
    %v1610 = vpop.f32.mrf.mxu0
    %v1611 = vadd.f32 %v1597, %v1610
    %v1612 = vpop.f32.mrf.mxu0
    %v1613 = vadd.f32 %v1599, %v1612
    %1614 = vdwg.mxu0
    %1615 = vmatpush.bf16.msra.mxu0 %v1258
    %1616 = vmatpush.bf16.msra.mxu0 %v1254
    %1617 = vmatpush.bf16.msra.mxu0 %v1250
    %1618 = vmatpush.bf16.msra.mxu0 %v1246
    %1619 = vmatpush.bf16.msra.mxu0 %v1242
    %1620 = vmatpush.bf16.msra.mxu0 %v1238
    %1621 = vmatpush.bf16.msra.mxu0 %v1234
    %1622 = vmatpush.bf16.msra.mxu0 %v1230
    %1623 = vmatmul.bf16.gmra.mxu0 %v639
    %v1624 = vpop.f32.mrf.mxu0
    %v1625 = vadd.f32 %v1611, %v1624
    %v1626 = vpop.f32.mrf.mxu0
    %v1627 = vadd.f32 %v1613, %v1626
    %1628 = vdwg.mxu0
    %1629 = vmatpush.bf16.msra.mxu0 %v1290
    %1630 = vmatpush.bf16.msra.mxu0 %v1286
    %1631 = vmatpush.bf16.msra.mxu0 %v1282
    %1632 = vmatpush.bf16.msra.mxu0 %v1278
    %1633 = vmatpush.bf16.msra.mxu0 %v1274
    %1634 = vmatpush.bf16.msra.mxu0 %v1270
    %1635 = vmatpush.bf16.msra.mxu0 %v1266
    %1636 = vmatpush.bf16.msra.mxu0 %v1262
    %1637 = vmatmul.bf16.gmra.mxu0 %v640
    %v1638 = vpop.f32.mrf.mxu0
    %v1639 = vadd.f32 %v1625, %v1638
    %v1640 = vpop.f32.mrf.mxu0
    %v1641 = vadd.f32 %v1627, %v1640
    %1642 = vdwg.mxu0
    %v1643 = vmax.f32 %v1471, 0.0
    %v1644 = vmax.f32 %v1527, 0.0
    %v1645 = vmax.f32 %v1583, 0.0
    %v1646 = vmax.f32 %v1639, 0.0
    %v1647 = vmax.f32 %v1473, 0.0
    %v1648 = vmax.f32 %v1529, 0.0
    %v1649 = vmax.f32 %v1585, 0.0
    %v1650 = vmax.f32 %v1641, 0.0
    %v1651 = vpack.c.bf16 %v1647, %v1643
    %v1652 = vpack.c.bf16 %v1648, %v1644
    %v1653 = vpack.c.bf16 %v1649, %v1645
    %v1654 = vpack.c.bf16 %v1650, %v1646
    %v1655 = vld [vmem:[#allocation11] sm:$0xf]
    %v1656 = vld [vmem:[#allocation11 + $0x4] sm:$0xf]
    %v1657 = vld [vmem:[#allocation11 + $0x8] sm:$0xf]
    %v1658 = vld [vmem:[#allocation11 + $0xc] sm:$0xf]
    %v1659 = vld [vmem:[#allocation11 + $0x10] sm:$0xf]
    %v1660 = vld [vmem:[#allocation11 + $0x14] sm:$0xf]
    %v1661 = vld [vmem:[#allocation11 + $0x18] sm:$0xf]
    %v1662 = vld [vmem:[#allocation11 + $0x1c] sm:$0xf]
    %v1663 = vld [vmem:[#allocation11 + $0x20] sm:$0xf]
    %v1664 = vld [vmem:[#allocation11 + $0x24] sm:$0xf]
    %v1665 = vld [vmem:[#allocation11 + $0x28] sm:$0xf]
    %v1666 = vld [vmem:[#allocation11 + $0x2c] sm:$0xf]
    %v1667 = vld [vmem:[#allocation11 + $0x30] sm:$0xf]
    %v1668 = vld [vmem:[#allocation11 + $0x34] sm:$0xf]
    %v1669 = vld [vmem:[#allocation11 + $0x38] sm:$0xf]
    %v1670 = vld [vmem:[#allocation11 + $0x3c] sm:$0xf]
    %v1671 = vld [vmem:[#allocation11 + $0x40] sm:$0xf]
    %v1672 = vld [vmem:[#allocation11 + $0x44] sm:$0xf]
    %v1673 = vld [vmem:[#allocation11 + $0x48] sm:$0xf]
    %v1674 = vld [vmem:[#allocation11 + $0x4c] sm:$0xf]
    %v1675 = vld [vmem:[#allocation11 + $0x50] sm:$0xf]
    %v1676 = vld [vmem:[#allocation11 + $0x54] sm:$0xf]
    %v1677 = vld [vmem:[#allocation11 + $0x58] sm:$0xf]
    %v1678 = vld [vmem:[#allocation11 + $0x5c] sm:$0xf]
    %v1679 = vld [vmem:[#allocation11 + $0x60] sm:$0xf]
    %v1680 = vld [vmem:[#allocation11 + $0x64] sm:$0xf]
    %v1681 = vld [vmem:[#allocation11 + $0x68] sm:$0xf]
    %v1682 = vld [vmem:[#allocation11 + $0x6c] sm:$0xf]
    %v1683 = vld [vmem:[#allocation11 + $0x70] sm:$0xf]
    %v1684 = vld [vmem:[#allocation11 + $0x74] sm:$0xf]
    %v1685 = vld [vmem:[#allocation11 + $0x78] sm:$0xf]
    %v1686 = vld [vmem:[#allocation11 + $0x7c] sm:$0xf]
    %v1687 = vld [vmem:[#allocation11 + $0x80] sm:$0xf]
    %v1688 = vld [vmem:[#allocation11 + $0x84] sm:$0xf]
    %v1689 = vld [vmem:[#allocation11 + $0x88] sm:$0xf]
    %v1690 = vld [vmem:[#allocation11 + $0x8c] sm:$0xf]
    %v1691 = vld [vmem:[#allocation11 + $0x90] sm:$0xf]
    %v1692 = vld [vmem:[#allocation11 + $0x94] sm:$0xf]
    %v1693 = vld [vmem:[#allocation11 + $0x98] sm:$0xf]
    %v1694 = vld [vmem:[#allocation11 + $0x9c] sm:$0xf]
    %v1695 = vld [vmem:[#allocation11 + $0xa0] sm:$0xf]
    %v1696 = vld [vmem:[#allocation11 + $0xa4] sm:$0xf]
    %v1697 = vld [vmem:[#allocation11 + $0xa8] sm:$0xf]
    %v1698 = vld [vmem:[#allocation11 + $0xac] sm:$0xf]
    %v1699 = vld [vmem:[#allocation11 + $0xb0] sm:$0xf]
    %v1700 = vld [vmem:[#allocation11 + $0xb4] sm:$0xf]
    %v1701 = vld [vmem:[#allocation11 + $0xb8] sm:$0xf]
    %v1702 = vld [vmem:[#allocation11 + $0xbc] sm:$0xf]
    %v1703 = vld [vmem:[#allocation11 + $0xc0] sm:$0xf]
    %v1704 = vld [vmem:[#allocation11 + $0xc4] sm:$0xf]
    %v1705 = vld [vmem:[#allocation11 + $0xc8] sm:$0xf]
    %v1706 = vld [vmem:[#allocation11 + $0xcc] sm:$0xf]
    %v1707 = vld [vmem:[#allocation11 + $0xd0] sm:$0xf]
    %v1708 = vld [vmem:[#allocation11 + $0xd4] sm:$0xf]
    %v1709 = vld [vmem:[#allocation11 + $0xd8] sm:$0xf]
    %v1710 = vld [vmem:[#allocation11 + $0xdc] sm:$0xf]
    %v1711 = vld [vmem:[#allocation11 + $0xe0] sm:$0xf]
    %v1712 = vld [vmem:[#allocation11 + $0xe4] sm:$0xf]
    %v1713 = vld [vmem:[#allocation11 + $0xe8] sm:$0xf]
    %v1714 = vld [vmem:[#allocation11 + $0xec] sm:$0xf]
    %v1715 = vld [vmem:[#allocation11 + $0xf0] sm:$0xf]
    %v1716 = vld [vmem:[#allocation11 + $0xf4] sm:$0xf]
    %v1717 = vld [vmem:[#allocation11 + $0xf8] sm:$0xf]
    %v1718 = vld [vmem:[#allocation11 + $0xfc] sm:$0xf]
    %v1719 = vld [vmem:[%s6] sm:$0x1]
    %v1721 = vperm.slane %v1719, 0
    %v1787 = vunpack.c.l.b16 %v1655
    %v1788 = vunpack.c.l.b16 %v1656
    %v1789 = vunpack.c.l.b16 %v1657
    %v1790 = vunpack.c.l.b16 %v1658
    %v1791 = vunpack.c.l.b16 %v1659
    %v1792 = vunpack.c.l.b16 %v1660
    %v1793 = vunpack.c.l.b16 %v1661
    %v1794 = vunpack.c.l.b16 %v1662
    %v1795 = vunpack.c.l.b16 %v1663
    %v1796 = vunpack.c.l.b16 %v1664
    %v1797 = vunpack.c.l.b16 %v1665
    %v1798 = vunpack.c.l.b16 %v1666
    %v1799 = vunpack.c.l.b16 %v1667
    %v1800 = vunpack.c.l.b16 %v1668
    %v1801 = vunpack.c.l.b16 %v1669
    %v1802 = vunpack.c.l.b16 %v1670
    %v1803 = vunpack.c.l.b16 %v1671
    %v1804 = vunpack.c.l.b16 %v1672
    %v1805 = vunpack.c.l.b16 %v1673
    %v1806 = vunpack.c.l.b16 %v1674
    %v1807 = vunpack.c.l.b16 %v1675
    %v1808 = vunpack.c.l.b16 %v1676
    %v1809 = vunpack.c.l.b16 %v1677
    %v1810 = vunpack.c.l.b16 %v1678
    %v1811 = vunpack.c.l.b16 %v1679
    %v1812 = vunpack.c.l.b16 %v1680
    %v1813 = vunpack.c.l.b16 %v1681
    %v1814 = vunpack.c.l.b16 %v1682
    %v1815 = vunpack.c.l.b16 %v1683
    %v1816 = vunpack.c.l.b16 %v1684
    %v1817 = vunpack.c.l.b16 %v1685
    %v1818 = vunpack.c.l.b16 %v1686
    %v1819 = vunpack.c.l.b16 %v1687
    %v1820 = vunpack.c.l.b16 %v1688
    %v1821 = vunpack.c.l.b16 %v1689
    %v1822 = vunpack.c.l.b16 %v1690
    %v1823 = vunpack.c.l.b16 %v1691
    %v1824 = vunpack.c.l.b16 %v1692
    %v1825 = vunpack.c.l.b16 %v1693
    %v1826 = vunpack.c.l.b16 %v1694
    %v1827 = vunpack.c.l.b16 %v1695
    %v1828 = vunpack.c.l.b16 %v1696
    %v1829 = vunpack.c.l.b16 %v1697
    %v1830 = vunpack.c.l.b16 %v1698
    %v1831 = vunpack.c.l.b16 %v1699
    %v1832 = vunpack.c.l.b16 %v1700
    %v1833 = vunpack.c.l.b16 %v1701
    %v1834 = vunpack.c.l.b16 %v1702
    %v1835 = vunpack.c.l.b16 %v1703
    %v1836 = vunpack.c.l.b16 %v1704
    %v1837 = vunpack.c.l.b16 %v1705
    %v1838 = vunpack.c.l.b16 %v1706
    %v1839 = vunpack.c.l.b16 %v1707
    %v1840 = vunpack.c.l.b16 %v1708
    %v1841 = vunpack.c.l.b16 %v1709
    %v1842 = vunpack.c.l.b16 %v1710
    %v1843 = vunpack.c.l.b16 %v1711
    %v1844 = vunpack.c.l.b16 %v1712
    %v1845 = vunpack.c.l.b16 %v1713
    %v1846 = vunpack.c.l.b16 %v1714
    %v1847 = vunpack.c.l.b16 %v1715
    %v1848 = vunpack.c.l.b16 %v1716
    %v1849 = vunpack.c.l.b16 %v1717
    %v1850 = vunpack.c.l.b16 %v1718
    %v1851 = vpack.c.b16 %v1788, %v1787
    %v1852 = vpack.c.b16 %v1790, %v1789
    %v1853 = vpack.c.b16 %v1792, %v1791
    %v1854 = vpack.c.b16 %v1794, %v1793
    %v1855 = vpack.c.b16 %v1796, %v1795
    %v1856 = vpack.c.b16 %v1798, %v1797
    %v1857 = vpack.c.b16 %v1800, %v1799
    %v1858 = vpack.c.b16 %v1802, %v1801
    %v1859 = vpack.c.b16 %v1804, %v1803
    %v1860 = vpack.c.b16 %v1806, %v1805
    %v1861 = vpack.c.b16 %v1808, %v1807
    %v1862 = vpack.c.b16 %v1810, %v1809
    %v1863 = vpack.c.b16 %v1812, %v1811
    %v1864 = vpack.c.b16 %v1814, %v1813
    %v1865 = vpack.c.b16 %v1816, %v1815
    %v1866 = vpack.c.b16 %v1818, %v1817
    %v1867 = vpack.c.b16 %v1820, %v1819
    %v1868 = vpack.c.b16 %v1822, %v1821
    %v1869 = vpack.c.b16 %v1824, %v1823
    %v1870 = vpack.c.b16 %v1826, %v1825
    %v1871 = vpack.c.b16 %v1828, %v1827
    %v1872 = vpack.c.b16 %v1830, %v1829
    %v1873 = vpack.c.b16 %v1832, %v1831
    %v1874 = vpack.c.b16 %v1834, %v1833
    %v1875 = vpack.c.b16 %v1836, %v1835
    %v1876 = vpack.c.b16 %v1838, %v1837
    %v1877 = vpack.c.b16 %v1840, %v1839
    %v1878 = vpack.c.b16 %v1842, %v1841
    %v1879 = vpack.c.b16 %v1844, %v1843
    %v1880 = vpack.c.b16 %v1846, %v1845
    %v1881 = vpack.c.b16 %v1848, %v1847
    %v1882 = vpack.c.b16 %v1850, %v1849
    %1915 = vmatpush.bf16.msra.mxu0 %v1858
    %1916 = vmatpush.bf16.msra.mxu0 %v1857
    %1917 = vmatpush.bf16.msra.mxu0 %v1856
    %1918 = vmatpush.bf16.msra.mxu0 %v1855
    %1919 = vmatpush.bf16.msra.mxu0 %v1854
    %1920 = vmatpush.bf16.msra.mxu0 %v1853
    %1921 = vmatpush.bf16.msra.mxu0 %v1852
    %1922 = vmatpush.bf16.msra.mxu0 %v1851
    %1923 = vmatmul.bf16.gmra.mxu0 %v1651
    %v1924 = vpop.f32.mrf.mxu0
    %v1925 = vadd.f32 %v1721, %v1924
    %v1926 = vpop.f32.mrf.mxu0
    %v1927 = vadd.f32 %v1721, %v1926
    %1928 = vdwg.mxu0
    %1929 = vmatpush.bf16.msra.mxu0 %v1866
    %1930 = vmatpush.bf16.msra.mxu0 %v1865
    %1931 = vmatpush.bf16.msra.mxu0 %v1864
    %1932 = vmatpush.bf16.msra.mxu0 %v1863
    %1933 = vmatpush.bf16.msra.mxu0 %v1862
    %1934 = vmatpush.bf16.msra.mxu0 %v1861
    %1935 = vmatpush.bf16.msra.mxu0 %v1860
    %1936 = vmatpush.bf16.msra.mxu0 %v1859
    %1937 = vmatmul.bf16.gmra.mxu0 %v1652
    %v1938 = vpop.f32.mrf.mxu0
    %v1939 = vadd.f32 %v1925, %v1938
    %v1940 = vpop.f32.mrf.mxu0
    %v1941 = vadd.f32 %v1927, %v1940
    %1942 = vdwg.mxu0
    %1943 = vmatpush.bf16.msra.mxu0 %v1874
    %1944 = vmatpush.bf16.msra.mxu0 %v1873
    %1945 = vmatpush.bf16.msra.mxu0 %v1872
    %1946 = vmatpush.bf16.msra.mxu0 %v1871
    %1947 = vmatpush.bf16.msra.mxu0 %v1870
    %1948 = vmatpush.bf16.msra.mxu0 %v1869
    %1949 = vmatpush.bf16.msra.mxu0 %v1868
    %1950 = vmatpush.bf16.msra.mxu0 %v1867
    %1951 = vmatmul.bf16.gmra.mxu0 %v1653
    %v1952 = vpop.f32.mrf.mxu0
    %v1953 = vadd.f32 %v1939, %v1952
    %v1954 = vpop.f32.mrf.mxu0
    %v1955 = vadd.f32 %v1941, %v1954
    %1956 = vdwg.mxu0
    %1957 = vmatpush.bf16.msra.mxu0 %v1882
    %1958 = vmatpush.bf16.msra.mxu0 %v1881
    %1959 = vmatpush.bf16.msra.mxu0 %v1880
    %1960 = vmatpush.bf16.msra.mxu0 %v1879
    %1961 = vmatpush.bf16.msra.mxu0 %v1878
    %1962 = vmatpush.bf16.msra.mxu0 %v1877
    %1963 = vmatpush.bf16.msra.mxu0 %v1876
    %1964 = vmatpush.bf16.msra.mxu0 %v1875
    %1965 = vmatmul.bf16.gmra.mxu0 %v1654
    %v1966 = vpop.f32.mrf.mxu0
    %v1967 = vadd.f32 %v1953, %v1966
    %v1968 = vpop.f32.mrf.mxu0
    %v1969 = vadd.f32 %v1955, %v1968
    %1970 = vdwg.mxu0
    %v1971 = vtanh.pop %v1967
    %v1972 = vtanh.pop %v1969
    %v1973 = vmul.f32 %v1971, 0.01
    %v1974 = vmul.f32 %v1972, 0.01
    %1975 = vst [vmem:[#allocation13] sm:$0xff] %v1973
    %1976 = vst [vmem:[#allocation13 + $0x8] sm:$0xff] %v1974
    // Predicated region
    $region54: #{actor_forward.1} parent=1 // pred_check
      _
    $region55: #{actor_forward.1} parent=1 // pred_check_branch
      %1978 = sbr.rel (0) target = $region57
    $region56: #{actor_forward.1} parent=1 // pred_region
      %1980 = vsyncadd [#allocation4], 0
      %s1981 = sshll.u32 [#allocation13], 4
      %s1982 = int_to_ptr.vmem [resolvable:$true] %s1981
      %s1983 = sshll.u32 %s7, 4
      %s1984 = int_to_ptr.hbm [resolvable:$true] %s1983
      %1989 = dma.vmem_to_hbm [thread:$0]  %s1982, 256, %s1984, [#allocation4], 128, 128, 8
    $region57: #{actor_forward.1} parent=1 // pred_fallthru
      _
    // Predicated region
    $region58: #{actor_forward.1} parent=1 // pred_check
      _
    $region59: #{actor_forward.1} parent=1 // pred_check_branch
      %1991 = sbr.rel (0) target = $region61
    $region60: #{actor_forward.1} parent=1 // pred_region
      %1993 = dma.done [#allocation4], 256
    $region61: #{actor_forward.1} parent=1 // pred_fallthru
      _
    %1994 = vsyncpa [#allocation3], 1
    %1995 = vsyncpa [#allocation6], 1
    %1996 = vsyncpa [#allocation9], 1
    %1997 = vsyncpa [#allocation12], 1
    %1998 = vsyncpa [#allocation4], 1

</llo_original>
